<compile_context>
chip_gen: v6e
topology: v6e:2x2x1
jax: 0.10.0
libtpu: 0.0.40
codegen_flags: <defaults>
</compile_context>

<pallas_src>
import math
import functools

import jax
import jax.numpy as jnp
import numpy as np
from jax.experimental import pallas as pl
from jax.experimental.pallas import tpu as pltpu


def _wconv_kernel(x_ref, w_ref, b_ref, o_ref, *, N, K, Cout, HW, use_mxu):
    # x_ref : (N, K, HW)     tap-stacked (im2col) input, padding already applied
    # w_ref : (Cout, K)      if use_mxu  else  (K, Cout, 1)    (scale pre-folded)
    # b_ref : (Cout, 1)
    # o_ref : (N, Cout, HW)  lane-dense output (HW on the lane dim)
    b = b_ref[...]                                        # (Cout, 1)
    w = w_ref[...] if use_mxu else None
    for n in range(N):                                    # N is small & static
        if use_mxu:
            # Large-channel layers: one dense MXU matmul per image.
            acc = jnp.dot(w, x_ref[n], preferred_element_type=jnp.float32)
        else:
            # Small-channel layers: K broadcast-FMAs on the VPU,
            # acc(Cout, HW) += w_k(Cout, 1) * x_row(1, HW); no reshapes, no MXU.
            acc = jnp.zeros((Cout, HW), jnp.float32)
            for k in range(K):
                acc = acc + w_ref[k] * x_ref[n, k:k + 1, :]
        o_ref[n] = (acc + b).astype(o_ref.dtype)          # fused bias add


def weighted_conv2d(x, weight, bias, *, stride, padding, gain=2.0):
    """x: (N, Cin, H, W) NCHW; weight: (Cout, Cin, kH, kW) OIHW; bias: (Cout,)."""
    N, Cin, H, W = x.shape
    Cout, _, kH, kW = weight.shape
    K = Cin * kH * kW
    scale = float(gain) * math.sqrt(2.0 / K)

    Hout = (H + 2 * padding - kH) // stride + 1
    Wout = (W + 2 * padding - kW) // stride + 1
    HW = Hout * Wout

    # ---- wrapper-side layout plumbing (no FLOPs besides the K*Cout weight scale) ----
    # TODO(synk): at real pro_gan sizes, replace the explicit pad + tap-stack with a
    # row-tiled grid over Hout (in-kernel tap slicing, vmem_limit_bytes set) so the
    # activation is not duplicated kH*kW times and the block fits v7x's 64 MiB VMEM.
    xp = jnp.pad(x.astype(jnp.float32),
                 ((0, 0), (0, 0), (padding, padding), (padding, padding)))
    taps = []
    for kh in range(kH):
        for kw in range(kW):
            taps.append(xp[:, :,
                           kh:kh + (Hout - 1) * stride + 1:stride,
                           kw:kw + (Wout - 1) * stride + 1:stride])
    # (N, Cin, kH*kW, Hout, Wout) -> (N, K, HW); row order (cin, kh, kw) matches
    # weight.reshape(Cout, Cin*kH*kW).
    x_col = jnp.stack(taps, axis=2).reshape(N, K, HW)

    w_flat = (weight.astype(jnp.float32) * scale).reshape(Cout, K)  # fold scale into W
    b2d = bias.astype(jnp.float32).reshape(Cout, 1)

    # The MXU only pays off once both the contraction (K) and output-channel dims are
    # large; for small channel counts the VPU broadcast-FMA path avoids MXU push/pop
    # latency and tiny, mostly-padded matmuls.
    use_mxu = (Cout >= 128 and K >= 128)
    w_arg = w_flat if use_mxu else jnp.transpose(w_flat).reshape(K, Cout, 1)

    kernel = functools.partial(_wconv_kernel,
                               N=N, K=K, Cout=Cout, HW=HW, use_mxu=use_mxu)

    out = pl.pallas_call(
        kernel,
        out_shape=jax.ShapeDtypeStruct((N, Cout, HW), jnp.float32),
        in_specs=[pl.BlockSpec(memory_space=pltpu.MemorySpace.VMEM)] * 3,
        out_specs=pl.BlockSpec(memory_space=pltpu.MemorySpace.VMEM),
    )(x_col, w_arg, b2d)

    # Lane-dense kernel output -> NCHW is a pure reshape (no transpose pass).
    return out.reshape(N, Cout, Hout, Wout)


if __name__ == "__main__":
    # Module config: WeightedConv2d(4, 8, kernel_size=3, stride=1, padding=1, gain=2)
    N, Cin, H, W = 2, 4, 16, 16
    Cout, kH, kW = 8, 3, 3
    stride, padding, gain = 1, 1, 2.0

    key = jax.random.PRNGKey(0)
    kx, kw_ = jax.random.split(key)
    x = jax.random.normal(kx, (N, Cin, H, W), dtype=jnp.float32)
    # nn.init.normal_(self.conv.weight) -> Normal(0, 1)
    weight = jax.random.normal(kw_, (Cout, Cin, kH, kW), dtype=jnp.float32)
    # nn.init.constant_(self.bias, 0) -> zeros (stored as (1, Cout, 1, 1) in torch)
    bias = jnp.zeros((Cout,), dtype=jnp.float32)

    out = weighted_conv2d(x, weight, bias, stride=stride, padding=padding, gain=gain)
    out = jax.block_until_ready(out)

    # Pure-JAX reference with exact PyTorch semantics.
    scale = gain * math.sqrt(2.0 / (Cin * kH * kW))
    ref = jax.lax.conv_general_dilated(
        x * scale, weight,
        window_strides=(stride, stride),
        padding=[(padding, padding), (padding, padding)],
        dimension_numbers=("NCHW", "OIHW", "NCHW"),
    ) + bias.reshape(1, Cout, 1, 1)

    Hout = (H + 2 * padding - kH) // stride + 1
    Wout = (W + 2 * padding - kW) // stride + 1
    assert out.shape == (N, Cout, Hout, Wout)
    np.testing.assert_allclose(np.asarray(out), np.asarray(ref), rtol=1e-4, atol=1e-4)
    print("KERNEL_OK")
</pallas_src>

<mosaic_0001>
module attributes {stable_mosaic.version = 11 : i64} {
  func.func @_wconv_kernel(%arg0: memref<2x36x256xf32, #tpu.memory_space<vmem>>, %arg1: memref<36x8x1xf32, #tpu.memory_space<vmem>>, %arg2: memref<8x1xf32, #tpu.memory_space<vmem>>, %arg3: memref<2x8x256xf32, #tpu.memory_space<vmem>>) attributes {dimension_semantics = [], scalar_prefetch = 0 : i64, scratch_operands = 0 : i64, tpu.core_type = #tpu.core_type<tc>} {
    %c0 = arith.constant 0 : index
    %c0_0 = arith.constant 0 : index
    %0 = vector.load %arg2[%c0, %c0_0] : memref<8x1xf32, #tpu.memory_space<vmem>>, vector<8x1xf32>
    %cst = arith.constant 0.000000e+00 : f32
    %1 = vector.broadcast %cst : f32 to vector<8x256xf32>
    %c0_1 = arith.constant 0 : index
    %c0_2 = arith.constant 0 : index
    %c0_3 = arith.constant 0 : index
    %2 = vector.load %arg1[%c0_1, %c0_2, %c0_3] : memref<36x8x1xf32, #tpu.memory_space<vmem>>, vector<1x8x1xf32>
    %3 = vector.shape_cast %2 : vector<1x8x1xf32> to vector<8x1xf32>
    %c0_4 = arith.constant 0 : index
    %c0_5 = arith.constant 0 : index
    %c0_6 = arith.constant 0 : index
    %4 = vector.load %arg0[%c0_4, %c0_5, %c0_6] : memref<2x36x256xf32, #tpu.memory_space<vmem>>, vector<1x1x256xf32>
    %5 = vector.shape_cast %4 : vector<1x1x256xf32> to vector<1x256xf32>
    %6 = vector.broadcast %3 : vector<8x1xf32> to vector<8x256xf32>
    %7 = vector.broadcast %5 : vector<1x256xf32> to vector<8x256xf32>
    %8 = arith.mulf %6, %7 : vector<8x256xf32>
    %9 = arith.addf %1, %8 : vector<8x256xf32>
    %c1 = arith.constant 1 : index
    %c0_7 = arith.constant 0 : index
    %c0_8 = arith.constant 0 : index
    %10 = vector.load %arg1[%c1, %c0_7, %c0_8] : memref<36x8x1xf32, #tpu.memory_space<vmem>>, vector<1x8x1xf32>
    %11 = vector.shape_cast %10 : vector<1x8x1xf32> to vector<8x1xf32>
    %c0_9 = arith.constant 0 : index
    %c1_10 = arith.constant 1 : index
    %c0_11 = arith.constant 0 : index
    %12 = vector.load %arg0[%c0_9, %c1_10, %c0_11] : memref<2x36x256xf32, #tpu.memory_space<vmem>>, vector<1x1x256xf32>
    %13 = vector.shape_cast %12 : vector<1x1x256xf32> to vector<1x256xf32>
    %14 = vector.broadcast %11 : vector<8x1xf32> to vector<8x256xf32>
    %15 = vector.broadcast %13 : vector<1x256xf32> to vector<8x256xf32>
    %16 = arith.mulf %14, %15 : vector<8x256xf32>
    %17 = arith.addf %9, %16 : vector<8x256xf32>
    %c2 = arith.constant 2 : index
    %c0_12 = arith.constant 0 : index
    %c0_13 = arith.constant 0 : index
    %18 = vector.load %arg1[%c2, %c0_12, %c0_13] : memref<36x8x1xf32, #tpu.memory_space<vmem>>, vector<1x8x1xf32>
    %19 = vector.shape_cast %18 : vector<1x8x1xf32> to vector<8x1xf32>
    %c0_14 = arith.constant 0 : index
    %c2_15 = arith.constant 2 : index
    %c0_16 = arith.constant 0 : index
    %20 = vector.load %arg0[%c0_14, %c2_15, %c0_16] : memref<2x36x256xf32, #tpu.memory_space<vmem>>, vector<1x1x256xf32>
    %21 = vector.shape_cast %20 : vector<1x1x256xf32> to vector<1x256xf32>
    %22 = vector.broadcast %19 : vector<8x1xf32> to vector<8x256xf32>
    %23 = vector.broadcast %21 : vector<1x256xf32> to vector<8x256xf32>
    %24 = arith.mulf %22, %23 : vector<8x256xf32>
    %25 = arith.addf %17, %24 : vector<8x256xf32>
    %c3 = arith.constant 3 : index
    %c0_17 = arith.constant 0 : index
    %c0_18 = arith.constant 0 : index
    %26 = vector.load %arg1[%c3, %c0_17, %c0_18] : memref<36x8x1xf32, #tpu.memory_space<vmem>>, vector<1x8x1xf32>
    %27 = vector.shape_cast %26 : vector<1x8x1xf32> to vector<8x1xf32>
    %c0_19 = arith.constant 0 : index
    %c3_20 = arith.constant 3 : index
    %c0_21 = arith.constant 0 : index
    %28 = vector.load %arg0[%c0_19, %c3_20, %c0_21] : memref<2x36x256xf32, #tpu.memory_space<vmem>>, vector<1x1x256xf32>
    %29 = vector.shape_cast %28 : vector<1x1x256xf32> to vector<1x256xf32>
    %30 = vector.broadcast %27 : vector<8x1xf32> to vector<8x256xf32>
    %31 = vector.broadcast %29 : vector<1x256xf32> to vector<8x256xf32>
    %32 = arith.mulf %30, %31 : vector<8x256xf32>
    %33 = arith.addf %25, %32 : vector<8x256xf32>
    %c4 = arith.constant 4 : index
    %c0_22 = arith.constant 0 : index
    %c0_23 = arith.constant 0 : index
    %34 = vector.load %arg1[%c4, %c0_22, %c0_23] : memref<36x8x1xf32, #tpu.memory_space<vmem>>, vector<1x8x1xf32>
    %35 = vector.shape_cast %34 : vector<1x8x1xf32> to vector<8x1xf32>
    %c0_24 = arith.constant 0 : index
    %c4_25 = arith.constant 4 : index
    %c0_26 = arith.constant 0 : index
    %36 = vector.load %arg0[%c0_24, %c4_25, %c0_26] : memref<2x36x256xf32, #tpu.memory_space<vmem>>, vector<1x1x256xf32>
    %37 = vector.shape_cast %36 : vector<1x1x256xf32> to vector<1x256xf32>
    %38 = vector.broadcast %35 : vector<8x1xf32> to vector<8x256xf32>
    %39 = vector.broadcast %37 : vector<1x256xf32> to vector<8x256xf32>
    %40 = arith.mulf %38, %39 : vector<8x256xf32>
    %41 = arith.addf %33, %40 : vector<8x256xf32>
    %c5 = arith.constant 5 : index
    %c0_27 = arith.constant 0 : index
    %c0_28 = arith.constant 0 : index
    %42 = vector.load %arg1[%c5, %c0_27, %c0_28] : memref<36x8x1xf32, #tpu.memory_space<vmem>>, vector<1x8x1xf32>
    %43 = vector.shape_cast %42 : vector<1x8x1xf32> to vector<8x1xf32>
    %c0_29 = arith.constant 0 : index
    %c5_30 = arith.constant 5 : index
    %c0_31 = arith.constant 0 : index
    %44 = vector.load %arg0[%c0_29, %c5_30, %c0_31] : memref<2x36x256xf32, #tpu.memory_space<vmem>>, vector<1x1x256xf32>
    %45 = vector.shape_cast %44 : vector<1x1x256xf32> to vector<1x256xf32>
    %46 = vector.broadcast %43 : vector<8x1xf32> to vector<8x256xf32>
    %47 = vector.broadcast %45 : vector<1x256xf32> to vector<8x256xf32>
    %48 = arith.mulf %46, %47 : vector<8x256xf32>
    %49 = arith.addf %41, %48 : vector<8x256xf32>
    %c6 = arith.constant 6 : index
    %c0_32 = arith.constant 0 : index
    %c0_33 = arith.constant 0 : index
    %50 = vector.load %arg1[%c6, %c0_32, %c0_33] : memref<36x8x1xf32, #tpu.memory_space<vmem>>, vector<1x8x1xf32>
    %51 = vector.shape_cast %50 : vector<1x8x1xf32> to vector<8x1xf32>
    %c0_34 = arith.constant 0 : index
    %c6_35 = arith.constant 6 : index
    %c0_36 = arith.constant 0 : index
    %52 = vector.load %arg0[%c0_34, %c6_35, %c0_36] : memref<2x36x256xf32, #tpu.memory_space<vmem>>, vector<1x1x256xf32>
    %53 = vector.shape_cast %52 : vector<1x1x256xf32> to vector<1x256xf32>
    %54 = vector.broadcast %51 : vector<8x1xf32> to vector<8x256xf32>
    %55 = vector.broadcast %53 : vector<1x256xf32> to vector<8x256xf32>
    %56 = arith.mulf %54, %55 : vector<8x256xf32>
    %57 = arith.addf %49, %56 : vector<8x256xf32>
    %c7 = arith.constant 7 : index
    %c0_37 = arith.constant 0 : index
    %c0_38 = arith.constant 0 : index
    %58 = vector.load %arg1[%c7, %c0_37, %c0_38] : memref<36x8x1xf32, #tpu.memory_space<vmem>>, vector<1x8x1xf32>
    %59 = vector.shape_cast %58 : vector<1x8x1xf32> to vector<8x1xf32>
    %c0_39 = arith.constant 0 : index
    %c7_40 = arith.constant 7 : index
    %c0_41 = arith.constant 0 : index
    %60 = vector.load %arg0[%c0_39, %c7_40, %c0_41] : memref<2x36x256xf32, #tpu.memory_space<vmem>>, vector<1x1x256xf32>
    %61 = vector.shape_cast %60 : vector<1x1x256xf32> to vector<1x256xf32>
    %62 = vector.broadcast %59 : vector<8x1xf32> to vector<8x256xf32>
    %63 = vector.broadcast %61 : vector<1x256xf32> to vector<8x256xf32>
    %64 = arith.mulf %62, %63 : vector<8x256xf32>
    %65 = arith.addf %57, %64 : vector<8x256xf32>
    %c8 = arith.constant 8 : index
    %c0_42 = arith.constant 0 : index
    %c0_43 = arith.constant 0 : index
    %66 = vector.load %arg1[%c8, %c0_42, %c0_43] : memref<36x8x1xf32, #tpu.memory_space<vmem>>, vector<1x8x1xf32>
    %67 = vector.shape_cast %66 : vector<1x8x1xf32> to vector<8x1xf32>
    %c0_44 = arith.constant 0 : index
    %c8_45 = arith.constant 8 : index
    %c0_46 = arith.constant 0 : index
    %68 = vector.load %arg0[%c0_44, %c8_45, %c0_46] : memref<2x36x256xf32, #tpu.memory_space<vmem>>, vector<1x1x256xf32>
    %69 = vector.shape_cast %68 : vector<1x1x256xf32> to vector<1x256xf32>
    %70 = vector.broadcast %67 : vector<8x1xf32> to vector<8x256xf32>
    %71 = vector.broadcast %69 : vector<1x256xf32> to vector<8x256xf32>
    %72 = arith.mulf %70, %71 : vector<8x256xf32>
    %73 = arith.addf %65, %72 : vector<8x256xf32>
    %c9 = arith.constant 9 : index
    %c0_47 = arith.constant 0 : index
    %c0_48 = arith.constant 0 : index
    %74 = vector.load %arg1[%c9, %c0_47, %c0_48] : memref<36x8x1xf32, #tpu.memory_space<vmem>>, vector<1x8x1xf32>
    %75 = vector.shape_cast %74 : vector<1x8x1xf32> to vector<8x1xf32>
    %c0_49 = arith.constant 0 : index
    %c9_50 = arith.constant 9 : index
    %c0_51 = arith.constant 0 : index
    %76 = vector.load %arg0[%c0_49, %c9_50, %c0_51] : memref<2x36x256xf32, #tpu.memory_space<vmem>>, vector<1x1x256xf32>
    %77 = vector.shape_cast %76 : vector<1x1x256xf32> to vector<1x256xf32>
    %78 = vector.broadcast %75 : vector<8x1xf32> to vector<8x256xf32>
    %79 = vector.broadcast %77 : vector<1x256xf32> to vector<8x256xf32>
    %80 = arith.mulf %78, %79 : vector<8x256xf32>
    %81 = arith.addf %73, %80 : vector<8x256xf32>
    %c10 = arith.constant 10 : index
    %c0_52 = arith.constant 0 : index
    %c0_53 = arith.constant 0 : index
    %82 = vector.load %arg1[%c10, %c0_52, %c0_53] : memref<36x8x1xf32, #tpu.memory_space<vmem>>, vector<1x8x1xf32>
    %83 = vector.shape_cast %82 : vector<1x8x1xf32> to vector<8x1xf32>
    %c0_54 = arith.constant 0 : index
    %c10_55 = arith.constant 10 : index
    %c0_56 = arith.constant 0 : index
    %84 = vector.load %arg0[%c0_54, %c10_55, %c0_56] : memref<2x36x256xf32, #tpu.memory_space<vmem>>, vector<1x1x256xf32>
    %85 = vector.shape_cast %84 : vector<1x1x256xf32> to vector<1x256xf32>
    %86 = vector.broadcast %83 : vector<8x1xf32> to vector<8x256xf32>
    %87 = vector.broadcast %85 : vector<1x256xf32> to vector<8x256xf32>
    %88 = arith.mulf %86, %87 : vector<8x256xf32>
    %89 = arith.addf %81, %88 : vector<8x256xf32>
    %c11 = arith.constant 11 : index
    %c0_57 = arith.constant 0 : index
    %c0_58 = arith.constant 0 : index
    %90 = vector.load %arg1[%c11, %c0_57, %c0_58] : memref<36x8x1xf32, #tpu.memory_space<vmem>>, vector<1x8x1xf32>
    %91 = vector.shape_cast %90 : vector<1x8x1xf32> to vector<8x1xf32>
    %c0_59 = arith.constant 0 : index
    %c11_60 = arith.constant 11 : index
    %c0_61 = arith.constant 0 : index
    %92 = vector.load %arg0[%c0_59, %c11_60, %c0_61] : memref<2x36x256xf32, #tpu.memory_space<vmem>>, vector<1x1x256xf32>
    %93 = vector.shape_cast %92 : vector<1x1x256xf32> to vector<1x256xf32>
    %94 = vector.broadcast %91 : vector<8x1xf32> to vector<8x256xf32>
    %95 = vector.broadcast %93 : vector<1x256xf32> to vector<8x256xf32>
    %96 = arith.mulf %94, %95 : vector<8x256xf32>
    %97 = arith.addf %89, %96 : vector<8x256xf32>
    %c12 = arith.constant 12 : index
    %c0_62 = arith.constant 0 : index
    %c0_63 = arith.constant 0 : index
    %98 = vector.load %arg1[%c12, %c0_62, %c0_63] : memref<36x8x1xf32, #tpu.memory_space<vmem>>, vector<1x8x1xf32>
    %99 = vector.shape_cast %98 : vector<1x8x1xf32> to vector<8x1xf32>
    %c0_64 = arith.constant 0 : index
    %c12_65 = arith.constant 12 : index
    %c0_66 = arith.constant 0 : index
    %100 = vector.load %arg0[%c0_64, %c12_65, %c0_66] : memref<2x36x256xf32, #tpu.memory_space<vmem>>, vector<1x1x256xf32>
    %101 = vector.shape_cast %100 : vector<1x1x256xf32> to vector<1x256xf32>
    %102 = vector.broadcast %99 : vector<8x1xf32> to vector<8x256xf32>
    %103 = vector.broadcast %101 : vector<1x256xf32> to vector<8x256xf32>
    %104 = arith.mulf %102, %103 : vector<8x256xf32>
    %105 = arith.addf %97, %104 : vector<8x256xf32>
    %c13 = arith.constant 13 : index
    %c0_67 = arith.constant 0 : index
    %c0_68 = arith.constant 0 : index
    %106 = vector.load %arg1[%c13, %c0_67, %c0_68] : memref<36x8x1xf32, #tpu.memory_space<vmem>>, vector<1x8x1xf32>
    %107 = vector.shape_cast %106 : vector<1x8x1xf32> to vector<8x1xf32>
    %c0_69 = arith.constant 0 : index
    %c13_70 = arith.constant 13 : index
    %c0_71 = arith.constant 0 : index
    %108 = vector.load %arg0[%c0_69, %c13_70, %c0_71] : memref<2x36x256xf32, #tpu.memory_space<vmem>>, vector<1x1x256xf32>
    %109 = vector.shape_cast %108 : vector<1x1x256xf32> to vector<1x256xf32>
    %110 = vector.broadcast %107 : vector<8x1xf32> to vector<8x256xf32>
    %111 = vector.broadcast %109 : vector<1x256xf32> to vector<8x256xf32>
    %112 = arith.mulf %110, %111 : vector<8x256xf32>
    %113 = arith.addf %105, %112 : vector<8x256xf32>
    %c14 = arith.constant 14 : index
    %c0_72 = arith.constant 0 : index
    %c0_73 = arith.constant 0 : index
    %114 = vector.load %arg1[%c14, %c0_72, %c0_73] : memref<36x8x1xf32, #tpu.memory_space<vmem>>, vector<1x8x1xf32>
    %115 = vector.shape_cast %114 : vector<1x8x1xf32> to vector<8x1xf32>
    %c0_74 = arith.constant 0 : index
    %c14_75 = arith.constant 14 : index
    %c0_76 = arith.constant 0 : index
    %116 = vector.load %arg0[%c0_74, %c14_75, %c0_76] : memref<2x36x256xf32, #tpu.memory_space<vmem>>, vector<1x1x256xf32>
    %117 = vector.shape_cast %116 : vector<1x1x256xf32> to vector<1x256xf32>
    %118 = vector.broadcast %115 : vector<8x1xf32> to vector<8x256xf32>
    %119 = vector.broadcast %117 : vector<1x256xf32> to vector<8x256xf32>
    %120 = arith.mulf %118, %119 : vector<8x256xf32>
    %121 = arith.addf %113, %120 : vector<8x256xf32>
    %c15 = arith.constant 15 : index
    %c0_77 = arith.constant 0 : index
    %c0_78 = arith.constant 0 : index
    %122 = vector.load %arg1[%c15, %c0_77, %c0_78] : memref<36x8x1xf32, #tpu.memory_space<vmem>>, vector<1x8x1xf32>
    %123 = vector.shape_cast %122 : vector<1x8x1xf32> to vector<8x1xf32>
    %c0_79 = arith.constant 0 : index
    %c15_80 = arith.constant 15 : index
    %c0_81 = arith.constant 0 : index
    %124 = vector.load %arg0[%c0_79, %c15_80, %c0_81] : memref<2x36x256xf32, #tpu.memory_space<vmem>>, vector<1x1x256xf32>
    %125 = vector.shape_cast %124 : vector<1x1x256xf32> to vector<1x256xf32>
    %126 = vector.broadcast %123 : vector<8x1xf32> to vector<8x256xf32>
    %127 = vector.broadcast %125 : vector<1x256xf32> to vector<8x256xf32>
    %128 = arith.mulf %126, %127 : vector<8x256xf32>
    %129 = arith.addf %121, %128 : vector<8x256xf32>
    %c16 = arith.constant 16 : index
    %c0_82 = arith.constant 0 : index
    %c0_83 = arith.constant 0 : index
    %130 = vector.load %arg1[%c16, %c0_82, %c0_83] : memref<36x8x1xf32, #tpu.memory_space<vmem>>, vector<1x8x1xf32>
    %131 = vector.shape_cast %130 : vector<1x8x1xf32> to vector<8x1xf32>
    %c0_84 = arith.constant 0 : index
    %c16_85 = arith.constant 16 : index
    %c0_86 = arith.constant 0 : index
    %132 = vector.load %arg0[%c0_84, %c16_85, %c0_86] : memref<2x36x256xf32, #tpu.memory_space<vmem>>, vector<1x1x256xf32>
    %133 = vector.shape_cast %132 : vector<1x1x256xf32> to vector<1x256xf32>
    %134 = vector.broadcast %131 : vector<8x1xf32> to vector<8x256xf32>
    %135 = vector.broadcast %133 : vector<1x256xf32> to vector<8x256xf32>
    %136 = arith.mulf %134, %135 : vector<8x256xf32>
    %137 = arith.addf %129, %136 : vector<8x256xf32>
    %c17 = arith.constant 17 : index
    %c0_87 = arith.constant 0 : index
    %c0_88 = arith.constant 0 : index
    %138 = vector.load %arg1[%c17, %c0_87, %c0_88] : memref<36x8x1xf32, #tpu.memory_space<vmem>>, vector<1x8x1xf32>
    %139 = vector.shape_cast %138 : vector<1x8x1xf32> to vector<8x1xf32>
    %c0_89 = arith.constant 0 : index
    %c17_90 = arith.constant 17 : index
    %c0_91 = arith.constant 0 : index
    %140 = vector.load %arg0[%c0_89, %c17_90, %c0_91] : memref<2x36x256xf32, #tpu.memory_space<vmem>>, vector<1x1x256xf32>
    %141 = vector.shape_cast %140 : vector<1x1x256xf32> to vector<1x256xf32>
    %142 = vector.broadcast %139 : vector<8x1xf32> to vector<8x256xf32>
    %143 = vector.broadcast %141 : vector<1x256xf32> to vector<8x256xf32>
    %144 = arith.mulf %142, %143 : vector<8x256xf32>
    %145 = arith.addf %137, %144 : vector<8x256xf32>
    %c18 = arith.constant 18 : index
    %c0_92 = arith.constant 0 : index
    %c0_93 = arith.constant 0 : index
    %146 = vector.load %arg1[%c18, %c0_92, %c0_93] : memref<36x8x1xf32, #tpu.memory_space<vmem>>, vector<1x8x1xf32>
    %147 = vector.shape_cast %146 : vector<1x8x1xf32> to vector<8x1xf32>
    %c0_94 = arith.constant 0 : index
    %c18_95 = arith.constant 18 : index
    %c0_96 = arith.constant 0 : index
    %148 = vector.load %arg0[%c0_94, %c18_95, %c0_96] : memref<2x36x256xf32, #tpu.memory_space<vmem>>, vector<1x1x256xf32>
    %149 = vector.shape_cast %148 : vector<1x1x256xf32> to vector<1x256xf32>
    %150 = vector.broadcast %147 : vector<8x1xf32> to vector<8x256xf32>
    %151 = vector.broadcast %149 : vector<1x256xf32> to vector<8x256xf32>
    %152 = arith.mulf %150, %151 : vector<8x256xf32>
    %153 = arith.addf %145, %152 : vector<8x256xf32>
    %c19 = arith.constant 19 : index
    %c0_97 = arith.constant 0 : index
    %c0_98 = arith.constant 0 : index
    %154 = vector.load %arg1[%c19, %c0_97, %c0_98] : memref<36x8x1xf32, #tpu.memory_space<vmem>>, vector<1x8x1xf32>
    %155 = vector.shape_cast %154 : vector<1x8x1xf32> to vector<8x1xf32>
    %c0_99 = arith.constant 0 : index
    %c19_100 = arith.constant 19 : index
    %c0_101 = arith.constant 0 : index
    %156 = vector.load %arg0[%c0_99, %c19_100, %c0_101] : memref<2x36x256xf32, #tpu.memory_space<vmem>>, vector<1x1x256xf32>
    %157 = vector.shape_cast %156 : vector<1x1x256xf32> to vector<1x256xf32>
    %158 = vector.broadcast %155 : vector<8x1xf32> to vector<8x256xf32>
    %159 = vector.broadcast %157 : vector<1x256xf32> to vector<8x256xf32>
    %160 = arith.mulf %158, %159 : vector<8x256xf32>
    %161 = arith.addf %153, %160 : vector<8x256xf32>
    %c20 = arith.constant 20 : index
    %c0_102 = arith.constant 0 : index
    %c0_103 = arith.constant 0 : index
    %162 = vector.load %arg1[%c20, %c0_102, %c0_103] : memref<36x8x1xf32, #tpu.memory_space<vmem>>, vector<1x8x1xf32>
    %163 = vector.shape_cast %162 : vector<1x8x1xf32> to vector<8x1xf32>
    %c0_104 = arith.constant 0 : index
    %c20_105 = arith.constant 20 : index
    %c0_106 = arith.constant 0 : index
    %164 = vector.load %arg0[%c0_104, %c20_105, %c0_106] : memref<2x36x256xf32, #tpu.memory_space<vmem>>, vector<1x1x256xf32>
    %165 = vector.shape_cast %164 : vector<1x1x256xf32> to vector<1x256xf32>
    %166 = vector.broadcast %163 : vector<8x1xf32> to vector<8x256xf32>
    %167 = vector.broadcast %165 : vector<1x256xf32> to vector<8x256xf32>
    %168 = arith.mulf %166, %167 : vector<8x256xf32>
    %169 = arith.addf %161, %168 : vector<8x256xf32>
    %c21 = arith.constant 21 : index
    %c0_107 = arith.constant 0 : index
    %c0_108 = arith.constant 0 : index
    %170 = vector.load %arg1[%c21, %c0_107, %c0_108] : memref<36x8x1xf32, #tpu.memory_space<vmem>>, vector<1x8x1xf32>
    %171 = vector.shape_cast %170 : vector<1x8x1xf32> to vector<8x1xf32>
    %c0_109 = arith.constant 0 : index
    %c21_110 = arith.constant 21 : index
    %c0_111 = arith.constant 0 : index
    %172 = vector.load %arg0[%c0_109, %c21_110, %c0_111] : memref<2x36x256xf32, #tpu.memory_space<vmem>>, vector<1x1x256xf32>
    %173 = vector.shape_cast %172 : vector<1x1x256xf32> to vector<1x256xf32>
    %174 = vector.broadcast %171 : vector<8x1xf32> to vector<8x256xf32>
    %175 = vector.broadcast %173 : vector<1x256xf32> to vector<8x256xf32>
    %176 = arith.mulf %174, %175 : vector<8x256xf32>
    %177 = arith.addf %169, %176 : vector<8x256xf32>
    %c22 = arith.constant 22 : index
    %c0_112 = arith.constant 0 : index
    %c0_113 = arith.constant 0 : index
    %178 = vector.load %arg1[%c22, %c0_112, %c0_113] : memref<36x8x1xf32, #tpu.memory_space<vmem>>, vector<1x8x1xf32>
    %179 = vector.shape_cast %178 : vector<1x8x1xf32> to vector<8x1xf32>
    %c0_114 = arith.constant 0 : index
    %c22_115 = arith.constant 22 : index
    %c0_116 = arith.constant 0 : index
    %180 = vector.load %arg0[%c0_114, %c22_115, %c0_116] : memref<2x36x256xf32, #tpu.memory_space<vmem>>, vector<1x1x256xf32>
    %181 = vector.shape_cast %180 : vector<1x1x256xf32> to vector<1x256xf32>
    %182 = vector.broadcast %179 : vector<8x1xf32> to vector<8x256xf32>
    %183 = vector.broadcast %181 : vector<1x256xf32> to vector<8x256xf32>
    %184 = arith.mulf %182, %183 : vector<8x256xf32>
    %185 = arith.addf %177, %184 : vector<8x256xf32>
    %c23 = arith.constant 23 : index
    %c0_117 = arith.constant 0 : index
    %c0_118 = arith.constant 0 : index
    %186 = vector.load %arg1[%c23, %c0_117, %c0_118] : memref<36x8x1xf32, #tpu.memory_space<vmem>>, vector<1x8x1xf32>
    %187 = vector.shape_cast %186 : vector<1x8x1xf32> to vector<8x1xf32>
    %c0_119 = arith.constant 0 : index
    %c23_120 = arith.constant 23 : index
    %c0_121 = arith.constant 0 : index
    %188 = vector.load %arg0[%c0_119, %c23_120, %c0_121] : memref<2x36x256xf32, #tpu.memory_space<vmem>>, vector<1x1x256xf32>
    %189 = vector.shape_cast %188 : vector<1x1x256xf32> to vector<1x256xf32>
    %190 = vector.broadcast %187 : vector<8x1xf32> to vector<8x256xf32>
    %191 = vector.broadcast %189 : vector<1x256xf32> to vector<8x256xf32>
    %192 = arith.mulf %190, %191 : vector<8x256xf32>
    %193 = arith.addf %185, %192 : vector<8x256xf32>
    %c24 = arith.constant 24 : index
    %c0_122 = arith.constant 0 : index
    %c0_123 = arith.constant 0 : index
    %194 = vector.load %arg1[%c24, %c0_122, %c0_123] : memref<36x8x1xf32, #tpu.memory_space<vmem>>, vector<1x8x1xf32>
    %195 = vector.shape_cast %194 : vector<1x8x1xf32> to vector<8x1xf32>
    %c0_124 = arith.constant 0 : index
    %c24_125 = arith.constant 24 : index
    %c0_126 = arith.constant 0 : index
    %196 = vector.load %arg0[%c0_124, %c24_125, %c0_126] : memref<2x36x256xf32, #tpu.memory_space<vmem>>, vector<1x1x256xf32>
    %197 = vector.shape_cast %196 : vector<1x1x256xf32> to vector<1x256xf32>
    %198 = vector.broadcast %195 : vector<8x1xf32> to vector<8x256xf32>
    %199 = vector.broadcast %197 : vector<1x256xf32> to vector<8x256xf32>
    %200 = arith.mulf %198, %199 : vector<8x256xf32>
    %201 = arith.addf %193, %200 : vector<8x256xf32>
    %c25 = arith.constant 25 : index
    %c0_127 = arith.constant 0 : index
    %c0_128 = arith.constant 0 : index
    %202 = vector.load %arg1[%c25, %c0_127, %c0_128] : memref<36x8x1xf32, #tpu.memory_space<vmem>>, vector<1x8x1xf32>
    %203 = vector.shape_cast %202 : vector<1x8x1xf32> to vector<8x1xf32>
    %c0_129 = arith.constant 0 : index
    %c25_130 = arith.constant 25 : index
    %c0_131 = arith.constant 0 : index
    %204 = vector.load %arg0[%c0_129, %c25_130, %c0_131] : memref<2x36x256xf32, #tpu.memory_space<vmem>>, vector<1x1x256xf32>
    %205 = vector.shape_cast %204 : vector<1x1x256xf32> to vector<1x256xf32>
    %206 = vector.broadcast %203 : vector<8x1xf32> to vector<8x256xf32>
    %207 = vector.broadcast %205 : vector<1x256xf32> to vector<8x256xf32>
    %208 = arith.mulf %206, %207 : vector<8x256xf32>
    %209 = arith.addf %201, %208 : vector<8x256xf32>
    %c26 = arith.constant 26 : index
    %c0_132 = arith.constant 0 : index
    %c0_133 = arith.constant 0 : index
    %210 = vector.load %arg1[%c26, %c0_132, %c0_133] : memref<36x8x1xf32, #tpu.memory_space<vmem>>, vector<1x8x1xf32>
    %211 = vector.shape_cast %210 : vector<1x8x1xf32> to vector<8x1xf32>
    %c0_134 = arith.constant 0 : index
    %c26_135 = arith.constant 26 : index
    %c0_136 = arith.constant 0 : index
    %212 = vector.load %arg0[%c0_134, %c26_135, %c0_136] : memref<2x36x256xf32, #tpu.memory_space<vmem>>, vector<1x1x256xf32>
    %213 = vector.shape_cast %212 : vector<1x1x256xf32> to vector<1x256xf32>
    %214 = vector.broadcast %211 : vector<8x1xf32> to vector<8x256xf32>
    %215 = vector.broadcast %213 : vector<1x256xf32> to vector<8x256xf32>
    %216 = arith.mulf %214, %215 : vector<8x256xf32>
    %217 = arith.addf %209, %216 : vector<8x256xf32>
    %c27 = arith.constant 27 : index
    %c0_137 = arith.constant 0 : index
    %c0_138 = arith.constant 0 : index
    %218 = vector.load %arg1[%c27, %c0_137, %c0_138] : memref<36x8x1xf32, #tpu.memory_space<vmem>>, vector<1x8x1xf32>
    %219 = vector.shape_cast %218 : vector<1x8x1xf32> to vector<8x1xf32>
    %c0_139 = arith.constant 0 : index
    %c27_140 = arith.constant 27 : index
    %c0_141 = arith.constant 0 : index
    %220 = vector.load %arg0[%c0_139, %c27_140, %c0_141] : memref<2x36x256xf32, #tpu.memory_space<vmem>>, vector<1x1x256xf32>
    %221 = vector.shape_cast %220 : vector<1x1x256xf32> to vector<1x256xf32>
    %222 = vector.broadcast %219 : vector<8x1xf32> to vector<8x256xf32>
    %223 = vector.broadcast %221 : vector<1x256xf32> to vector<8x256xf32>
    %224 = arith.mulf %222, %223 : vector<8x256xf32>
    %225 = arith.addf %217, %224 : vector<8x256xf32>
    %c28 = arith.constant 28 : index
    %c0_142 = arith.constant 0 : index
    %c0_143 = arith.constant 0 : index
    %226 = vector.load %arg1[%c28, %c0_142, %c0_143] : memref<36x8x1xf32, #tpu.memory_space<vmem>>, vector<1x8x1xf32>
    %227 = vector.shape_cast %226 : vector<1x8x1xf32> to vector<8x1xf32>
    %c0_144 = arith.constant 0 : index
    %c28_145 = arith.constant 28 : index
    %c0_146 = arith.constant 0 : index
    %228 = vector.load %arg0[%c0_144, %c28_145, %c0_146] : memref<2x36x256xf32, #tpu.memory_space<vmem>>, vector<1x1x256xf32>
    %229 = vector.shape_cast %228 : vector<1x1x256xf32> to vector<1x256xf32>
    %230 = vector.broadcast %227 : vector<8x1xf32> to vector<8x256xf32>
    %231 = vector.broadcast %229 : vector<1x256xf32> to vector<8x256xf32>
    %232 = arith.mulf %230, %231 : vector<8x256xf32>
    %233 = arith.addf %225, %232 : vector<8x256xf32>
    %c29 = arith.constant 29 : index
    %c0_147 = arith.constant 0 : index
    %c0_148 = arith.constant 0 : index
    %234 = vector.load %arg1[%c29, %c0_147, %c0_148] : memref<36x8x1xf32, #tpu.memory_space<vmem>>, vector<1x8x1xf32>
    %235 = vector.shape_cast %234 : vector<1x8x1xf32> to vector<8x1xf32>
    %c0_149 = arith.constant 0 : index
    %c29_150 = arith.constant 29 : index
    %c0_151 = arith.constant 0 : index
    %236 = vector.load %arg0[%c0_149, %c29_150, %c0_151] : memref<2x36x256xf32, #tpu.memory_space<vmem>>, vector<1x1x256xf32>
    %237 = vector.shape_cast %236 : vector<1x1x256xf32> to vector<1x256xf32>
    %238 = vector.broadcast %235 : vector<8x1xf32> to vector<8x256xf32>
    %239 = vector.broadcast %237 : vector<1x256xf32> to vector<8x256xf32>
    %240 = arith.mulf %238, %239 : vector<8x256xf32>
    %241 = arith.addf %233, %240 : vector<8x256xf32>
    %c30 = arith.constant 30 : index
    %c0_152 = arith.constant 0 : index
    %c0_153 = arith.constant 0 : index
    %242 = vector.load %arg1[%c30, %c0_152, %c0_153] : memref<36x8x1xf32, #tpu.memory_space<vmem>>, vector<1x8x1xf32>
    %243 = vector.shape_cast %242 : vector<1x8x1xf32> to vector<8x1xf32>
    %c0_154 = arith.constant 0 : index
    %c30_155 = arith.constant 30 : index
    %c0_156 = arith.constant 0 : index
    %244 = vector.load %arg0[%c0_154, %c30_155, %c0_156] : memref<2x36x256xf32, #tpu.memory_space<vmem>>, vector<1x1x256xf32>
    %245 = vector.shape_cast %244 : vector<1x1x256xf32> to vector<1x256xf32>
    %246 = vector.broadcast %243 : vector<8x1xf32> to vector<8x256xf32>
    %247 = vector.broadcast %245 : vector<1x256xf32> to vector<8x256xf32>
    %248 = arith.mulf %246, %247 : vector<8x256xf32>
    %249 = arith.addf %241, %248 : vector<8x256xf32>
    %c31 = arith.constant 31 : index
    %c0_157 = arith.constant 0 : index
    %c0_158 = arith.constant 0 : index
    %250 = vector.load %arg1[%c31, %c0_157, %c0_158] : memref<36x8x1xf32, #tpu.memory_space<vmem>>, vector<1x8x1xf32>
    %251 = vector.shape_cast %250 : vector<1x8x1xf32> to vector<8x1xf32>
    %c0_159 = arith.constant 0 : index
    %c31_160 = arith.constant 31 : index
    %c0_161 = arith.constant 0 : index
    %252 = vector.load %arg0[%c0_159, %c31_160, %c0_161] : memref<2x36x256xf32, #tpu.memory_space<vmem>>, vector<1x1x256xf32>
    %253 = vector.shape_cast %252 : vector<1x1x256xf32> to vector<1x256xf32>
    %254 = vector.broadcast %251 : vector<8x1xf32> to vector<8x256xf32>
    %255 = vector.broadcast %253 : vector<1x256xf32> to vector<8x256xf32>
    %256 = arith.mulf %254, %255 : vector<8x256xf32>
    %257 = arith.addf %249, %256 : vector<8x256xf32>
    %c32 = arith.constant 32 : index
    %c0_162 = arith.constant 0 : index
    %c0_163 = arith.constant 0 : index
    %258 = vector.load %arg1[%c32, %c0_162, %c0_163] : memref<36x8x1xf32, #tpu.memory_space<vmem>>, vector<1x8x1xf32>
    %259 = vector.shape_cast %258 : vector<1x8x1xf32> to vector<8x1xf32>
    %c0_164 = arith.constant 0 : index
    %c32_165 = arith.constant 32 : index
    %c0_166 = arith.constant 0 : index
    %260 = vector.load %arg0[%c0_164, %c32_165, %c0_166] : memref<2x36x256xf32, #tpu.memory_space<vmem>>, vector<1x1x256xf32>
    %261 = vector.shape_cast %260 : vector<1x1x256xf32> to vector<1x256xf32>
    %262 = vector.broadcast %259 : vector<8x1xf32> to vector<8x256xf32>
    %263 = vector.broadcast %261 : vector<1x256xf32> to vector<8x256xf32>
    %264 = arith.mulf %262, %263 : vector<8x256xf32>
    %265 = arith.addf %257, %264 : vector<8x256xf32>
    %c33 = arith.constant 33 : index
    %c0_167 = arith.constant 0 : index
    %c0_168 = arith.constant 0 : index
    %266 = vector.load %arg1[%c33, %c0_167, %c0_168] : memref<36x8x1xf32, #tpu.memory_space<vmem>>, vector<1x8x1xf32>
    %267 = vector.shape_cast %266 : vector<1x8x1xf32> to vector<8x1xf32>
    %c0_169 = arith.constant 0 : index
    %c33_170 = arith.constant 33 : index
    %c0_171 = arith.constant 0 : index
    %268 = vector.load %arg0[%c0_169, %c33_170, %c0_171] : memref<2x36x256xf32, #tpu.memory_space<vmem>>, vector<1x1x256xf32>
    %269 = vector.shape_cast %268 : vector<1x1x256xf32> to vector<1x256xf32>
    %270 = vector.broadcast %267 : vector<8x1xf32> to vector<8x256xf32>
    %271 = vector.broadcast %269 : vector<1x256xf32> to vector<8x256xf32>
    %272 = arith.mulf %270, %271 : vector<8x256xf32>
    %273 = arith.addf %265, %272 : vector<8x256xf32>
    %c34 = arith.constant 34 : index
    %c0_172 = arith.constant 0 : index
    %c0_173 = arith.constant 0 : index
    %274 = vector.load %arg1[%c34, %c0_172, %c0_173] : memref<36x8x1xf32, #tpu.memory_space<vmem>>, vector<1x8x1xf32>
    %275 = vector.shape_cast %274 : vector<1x8x1xf32> to vector<8x1xf32>
    %c0_174 = arith.constant 0 : index
    %c34_175 = arith.constant 34 : index
    %c0_176 = arith.constant 0 : index
    %276 = vector.load %arg0[%c0_174, %c34_175, %c0_176] : memref<2x36x256xf32, #tpu.memory_space<vmem>>, vector<1x1x256xf32>
    %277 = vector.shape_cast %276 : vector<1x1x256xf32> to vector<1x256xf32>
    %278 = vector.broadcast %275 : vector<8x1xf32> to vector<8x256xf32>
    %279 = vector.broadcast %277 : vector<1x256xf32> to vector<8x256xf32>
    %280 = arith.mulf %278, %279 : vector<8x256xf32>
    %281 = arith.addf %273, %280 : vector<8x256xf32>
    %c35 = arith.constant 35 : index
    %c0_177 = arith.constant 0 : index
    %c0_178 = arith.constant 0 : index
    %282 = vector.load %arg1[%c35, %c0_177, %c0_178] : memref<36x8x1xf32, #tpu.memory_space<vmem>>, vector<1x8x1xf32>
    %283 = vector.shape_cast %282 : vector<1x8x1xf32> to vector<8x1xf32>
    %c0_179 = arith.constant 0 : index
    %c35_180 = arith.constant 35 : index
    %c0_181 = arith.constant 0 : index
    %284 = vector.load %arg0[%c0_179, %c35_180, %c0_181] : memref<2x36x256xf32, #tpu.memory_space<vmem>>, vector<1x1x256xf32>
    %285 = vector.shape_cast %284 : vector<1x1x256xf32> to vector<1x256xf32>
    %286 = vector.broadcast %283 : vector<8x1xf32> to vector<8x256xf32>
    %287 = vector.broadcast %285 : vector<1x256xf32> to vector<8x256xf32>
    %288 = arith.mulf %286, %287 : vector<8x256xf32>
    %289 = arith.addf %281, %288 : vector<8x256xf32>
    %290 = vector.broadcast %0 : vector<8x1xf32> to vector<8x256xf32>
    %291 = arith.addf %289, %290 : vector<8x256xf32>
    %c0_182 = arith.constant 0 : index
    %c0_183 = arith.constant 0 : index
    %c0_184 = arith.constant 0 : index
    %292 = vector.load %arg3[%c0_182, %c0_183, %c0_184] : memref<2x8x256xf32, #tpu.memory_space<vmem>>, vector<1x8x256xf32>
    %293 = vector.shape_cast %292 : vector<1x8x256xf32> to vector<8x256xf32>
    %294 = vector.shape_cast %291 : vector<8x256xf32> to vector<1x8x256xf32>
    tpu.vector_store %arg3[%c0_182, %c0_183, %c0_184], %294 {strides = array<i32>} : memref<2x8x256xf32, #tpu.memory_space<vmem>>, vector<1x8x256xf32>,
    %cst_185 = arith.constant 0.000000e+00 : f32
    %295 = vector.broadcast %cst_185 : f32 to vector<8x256xf32>
    %c0_186 = arith.constant 0 : index
    %c0_187 = arith.constant 0 : index
    %c0_188 = arith.constant 0 : index
    %296 = vector.load %arg1[%c0_186, %c0_187, %c0_188] : memref<36x8x1xf32, #tpu.memory_space<vmem>>, vector<1x8x1xf32>
    %297 = vector.shape_cast %296 : vector<1x8x1xf32> to vector<8x1xf32>
    %c1_189 = arith.constant 1 : index
    %c0_190 = arith.constant 0 : index
    %c0_191 = arith.constant 0 : index
    %298 = vector.load %arg0[%c1_189, %c0_190, %c0_191] : memref<2x36x256xf32, #tpu.memory_space<vmem>>, vector<1x1x256xf32>
    %299 = vector.shape_cast %298 : vector<1x1x256xf32> to vector<1x256xf32>
    %300 = vector.broadcast %297 : vector<8x1xf32> to vector<8x256xf32>
    %301 = vector.broadcast %299 : vector<1x256xf32> to vector<8x256xf32>
    %302 = arith.mulf %300, %301 : vector<8x256xf32>
    %303 = arith.addf %295, %302 : vector<8x256xf32>
    %c1_192 = arith.constant 1 : index
    %c0_193 = arith.constant 0 : index
    %c0_194 = arith.constant 0 : index
    %304 = vector.load %arg1[%c1_192, %c0_193, %c0_194] : memref<36x8x1xf32, #tpu.memory_space<vmem>>, vector<1x8x1xf32>
    %305 = vector.shape_cast %304 : vector<1x8x1xf32> to vector<8x1xf32>
    %c1_195 = arith.constant 1 : index
    %c1_196 = arith.constant 1 : index
    %c0_197 = arith.constant 0 : index
    %306 = vector.load %arg0[%c1_195, %c1_196, %c0_197] : memref<2x36x256xf32, #tpu.memory_space<vmem>>, vector<1x1x256xf32>
    %307 = vector.shape_cast %306 : vector<1x1x256xf32> to vector<1x256xf32>
    %308 = vector.broadcast %305 : vector<8x1xf32> to vector<8x256xf32>
    %309 = vector.broadcast %307 : vector<1x256xf32> to vector<8x256xf32>
    %310 = arith.mulf %308, %309 : vector<8x256xf32>
    %311 = arith.addf %303, %310 : vector<8x256xf32>
    %c2_198 = arith.constant 2 : index
    %c0_199 = arith.constant 0 : index
    %c0_200 = arith.constant 0 : index
    %312 = vector.load %arg1[%c2_198, %c0_199, %c0_200] : memref<36x8x1xf32, #tpu.memory_space<vmem>>, vector<1x8x1xf32>
    %313 = vector.shape_cast %312 : vector<1x8x1xf32> to vector<8x1xf32>
    %c1_201 = arith.constant 1 : index
    %c2_202 = arith.constant 2 : index
    %c0_203 = arith.constant 0 : index
    %314 = vector.load %arg0[%c1_201, %c2_202, %c0_203] : memref<2x36x256xf32, #tpu.memory_space<vmem>>, vector<1x1x256xf32>
    %315 = vector.shape_cast %314 : vector<1x1x256xf32> to vector<1x256xf32>
    %316 = vector.broadcast %313 : vector<8x1xf32> to vector<8x256xf32>
    %317 = vector.broadcast %315 : vector<1x256xf32> to vector<8x256xf32>
    %318 = arith.mulf %316, %317 : vector<8x256xf32>
    %319 = arith.addf %311, %318 : vector<8x256xf32>
    %c3_204 = arith.constant 3 : index
    %c0_205 = arith.constant 0 : index
    %c0_206 = arith.constant 0 : index
    %320 = vector.load %arg1[%c3_204, %c0_205, %c0_206] : memref<36x8x1xf32, #tpu.memory_space<vmem>>, vector<1x8x1xf32>
    %321 = vector.shape_cast %320 : vector<1x8x1xf32> to vector<8x1xf32>
    %c1_207 = arith.constant 1 : index
    %c3_208 = arith.constant 3 : index
    %c0_209 = arith.constant 0 : index
    %322 = vector.load %arg0[%c1_207, %c3_208, %c0_209] : memref<2x36x256xf32, #tpu.memory_space<vmem>>, vector<1x1x256xf32>
    %323 = vector.shape_cast %322 : vector<1x1x256xf32> to vector<1x256xf32>
    %324 = vector.broadcast %321 : vector<8x1xf32> to vector<8x256xf32>
    %325 = vector.broadcast %323 : vector<1x256xf32> to vector<8x256xf32>
    %326 = arith.mulf %324, %325 : vector<8x256xf32>
    %327 = arith.addf %319, %326 : vector<8x256xf32>
    %c4_210 = arith.constant 4 : index
    %c0_211 = arith.constant 0 : index
    %c0_212 = arith.constant 0 : index
    %328 = vector.load %arg1[%c4_210, %c0_211, %c0_212] : memref<36x8x1xf32, #tpu.memory_space<vmem>>, vector<1x8x1xf32>
    %329 = vector.shape_cast %328 : vector<1x8x1xf32> to vector<8x1xf32>
    %c1_213 = arith.constant 1 : index
    %c4_214 = arith.constant 4 : index
    %c0_215 = arith.constant 0 : index
    %330 = vector.load %arg0[%c1_213, %c4_214, %c0_215] : memref<2x36x256xf32, #tpu.memory_space<vmem>>, vector<1x1x256xf32>
    %331 = vector.shape_cast %330 : vector<1x1x256xf32> to vector<1x256xf32>
    %332 = vector.broadcast %329 : vector<8x1xf32> to vector<8x256xf32>
    %333 = vector.broadcast %331 : vector<1x256xf32> to vector<8x256xf32>
    %334 = arith.mulf %332, %333 : vector<8x256xf32>
    %335 = arith.addf %327, %334 : vector<8x256xf32>
    %c5_216 = arith.constant 5 : index
    %c0_217 = arith.constant 0 : index
    %c0_218 = arith.constant 0 : index
    %336 = vector.load %arg1[%c5_216, %c0_217, %c0_218] : memref<36x8x1xf32, #tpu.memory_space<vmem>>, vector<1x8x1xf32>
    %337 = vector.shape_cast %336 : vector<1x8x1xf32> to vector<8x1xf32>
    %c1_219 = arith.constant 1 : index
    %c5_220 = arith.constant 5 : index
    %c0_221 = arith.constant 0 : index
    %338 = vector.load %arg0[%c1_219, %c5_220, %c0_221] : memref<2x36x256xf32, #tpu.memory_space<vmem>>, vector<1x1x256xf32>
    %339 = vector.shape_cast %338 : vector<1x1x256xf32> to vector<1x256xf32>
    %340 = vector.broadcast %337 : vector<8x1xf32> to vector<8x256xf32>
    %341 = vector.broadcast %339 : vector<1x256xf32> to vector<8x256xf32>
    %342 = arith.mulf %340, %341 : vector<8x256xf32>
    %343 = arith.addf %335, %342 : vector<8x256xf32>
    %c6_222 = arith.constant 6 : index
    %c0_223 = arith.constant 0 : index
    %c0_224 = arith.constant 0 : index
    %344 = vector.load %arg1[%c6_222, %c0_223, %c0_224] : memref<36x8x1xf32, #tpu.memory_space<vmem>>, vector<1x8x1xf32>
    %345 = vector.shape_cast %344 : vector<1x8x1xf32> to vector<8x1xf32>
    %c1_225 = arith.constant 1 : index
    %c6_226 = arith.constant 6 : index
    %c0_227 = arith.constant 0 : index
    %346 = vector.load %arg0[%c1_225, %c6_226, %c0_227] : memref<2x36x256xf32, #tpu.memory_space<vmem>>, vector<1x1x256xf32>
    %347 = vector.shape_cast %346 : vector<1x1x256xf32> to vector<1x256xf32>
    %348 = vector.broadcast %345 : vector<8x1xf32> to vector<8x256xf32>
    %349 = vector.broadcast %347 : vector<1x256xf32> to vector<8x256xf32>
    %350 = arith.mulf %348, %349 : vector<8x256xf32>
    %351 = arith.addf %343, %350 : vector<8x256xf32>
    %c7_228 = arith.constant 7 : index
    %c0_229 = arith.constant 0 : index
    %c0_230 = arith.constant 0 : index
    %352 = vector.load %arg1[%c7_228, %c0_229, %c0_230] : memref<36x8x1xf32, #tpu.memory_space<vmem>>, vector<1x8x1xf32>
    %353 = vector.shape_cast %352 : vector<1x8x1xf32> to vector<8x1xf32>
    %c1_231 = arith.constant 1 : index
    %c7_232 = arith.constant 7 : index
    %c0_233 = arith.constant 0 : index
    %354 = vector.load %arg0[%c1_231, %c7_232, %c0_233] : memref<2x36x256xf32, #tpu.memory_space<vmem>>, vector<1x1x256xf32>
    %355 = vector.shape_cast %354 : vector<1x1x256xf32> to vector<1x256xf32>
    %356 = vector.broadcast %353 : vector<8x1xf32> to vector<8x256xf32>
    %357 = vector.broadcast %355 : vector<1x256xf32> to vector<8x256xf32>
    %358 = arith.mulf %356, %357 : vector<8x256xf32>
    %359 = arith.addf %351, %358 : vector<8x256xf32>
    %c8_234 = arith.constant 8 : index
    %c0_235 = arith.constant 0 : index
    %c0_236 = arith.constant 0 : index
    %360 = vector.load %arg1[%c8_234, %c0_235, %c0_236] : memref<36x8x1xf32, #tpu.memory_space<vmem>>, vector<1x8x1xf32>
    %361 = vector.shape_cast %360 : vector<1x8x1xf32> to vector<8x1xf32>
    %c1_237 = arith.constant 1 : index
    %c8_238 = arith.constant 8 : index
    %c0_239 = arith.constant 0 : index
    %362 = vector.load %arg0[%c1_237, %c8_238, %c0_239] : memref<2x36x256xf32, #tpu.memory_space<vmem>>, vector<1x1x256xf32>
    %363 = vector.shape_cast %362 : vector<1x1x256xf32> to vector<1x256xf32>
    %364 = vector.broadcast %361 : vector<8x1xf32> to vector<8x256xf32>
    %365 = vector.broadcast %363 : vector<1x256xf32> to vector<8x256xf32>
    %366 = arith.mulf %364, %365 : vector<8x256xf32>
    %367 = arith.addf %359, %366 : vector<8x256xf32>
    %c9_240 = arith.constant 9 : index
    %c0_241 = arith.constant 0 : index
    %c0_242 = arith.constant 0 : index
    %368 = vector.load %arg1[%c9_240, %c0_241, %c0_242] : memref<36x8x1xf32, #tpu.memory_space<vmem>>, vector<1x8x1xf32>
    %369 = vector.shape_cast %368 : vector<1x8x1xf32> to vector<8x1xf32>
    %c1_243 = arith.constant 1 : index
    %c9_244 = arith.constant 9 : index
    %c0_245 = arith.constant 0 : index
    %370 = vector.load %arg0[%c1_243, %c9_244, %c0_245] : memref<2x36x256xf32, #tpu.memory_space<vmem>>, vector<1x1x256xf32>
    %371 = vector.shape_cast %370 : vector<1x1x256xf32> to vector<1x256xf32>
    %372 = vector.broadcast %369 : vector<8x1xf32> to vector<8x256xf32>
    %373 = vector.broadcast %371 : vector<1x256xf32> to vector<8x256xf32>
    %374 = arith.mulf %372, %373 : vector<8x256xf32>
    %375 = arith.addf %367, %374 : vector<8x256xf32>
    %c10_246 = arith.constant 10 : index
    %c0_247 = arith.constant 0 : index
    %c0_248 = arith.constant 0 : index
    %376 = vector.load %arg1[%c10_246, %c0_247, %c0_248] : memref<36x8x1xf32, #tpu.memory_space<vmem>>, vector<1x8x1xf32>
    %377 = vector.shape_cast %376 : vector<1x8x1xf32> to vector<8x1xf32>
    %c1_249 = arith.constant 1 : index
    %c10_250 = arith.constant 10 : index
    %c0_251 = arith.constant 0 : index
    %378 = vector.load %arg0[%c1_249, %c10_250, %c0_251] : memref<2x36x256xf32, #tpu.memory_space<vmem>>, vector<1x1x256xf32>
    %379 = vector.shape_cast %378 : vector<1x1x256xf32> to vector<1x256xf32>
    %380 = vector.broadcast %377 : vector<8x1xf32> to vector<8x256xf32>
    %381 = vector.broadcast %379 : vector<1x256xf32> to vector<8x256xf32>
    %382 = arith.mulf %380, %381 : vector<8x256xf32>
    %383 = arith.addf %375, %382 : vector<8x256xf32>
    %c11_252 = arith.constant 11 : index
    %c0_253 = arith.constant 0 : index
    %c0_254 = arith.constant 0 : index
    %384 = vector.load %arg1[%c11_252, %c0_253, %c0_254] : memref<36x8x1xf32, #tpu.memory_space<vmem>>, vector<1x8x1xf32>
    %385 = vector.shape_cast %384 : vector<1x8x1xf32> to vector<8x1xf32>
    %c1_255 = arith.constant 1 : index
    %c11_256 = arith.constant 11 : index
    %c0_257 = arith.constant 0 : index
    %386 = vector.load %arg0[%c1_255, %c11_256, %c0_257] : memref<2x36x256xf32, #tpu.memory_space<vmem>>, vector<1x1x256xf32>
    %387 = vector.shape_cast %386 : vector<1x1x256xf32> to vector<1x256xf32>
    %388 = vector.broadcast %385 : vector<8x1xf32> to vector<8x256xf32>
    %389 = vector.broadcast %387 : vector<1x256xf32> to vector<8x256xf32>
    %390 = arith.mulf %388, %389 : vector<8x256xf32>
    %391 = arith.addf %383, %390 : vector<8x256xf32>
    %c12_258 = arith.constant 12 : index
    %c0_259 = arith.constant 0 : index
    %c0_260 = arith.constant 0 : index
    %392 = vector.load %arg1[%c12_258, %c0_259, %c0_260] : memref<36x8x1xf32, #tpu.memory_space<vmem>>, vector<1x8x1xf32>
    %393 = vector.shape_cast %392 : vector<1x8x1xf32> to vector<8x1xf32>
    %c1_261 = arith.constant 1 : index
    %c12_262 = arith.constant 12 : index
    %c0_263 = arith.constant 0 : index
    %394 = vector.load %arg0[%c1_261, %c12_262, %c0_263] : memref<2x36x256xf32, #tpu.memory_space<vmem>>, vector<1x1x256xf32>
    %395 = vector.shape_cast %394 : vector<1x1x256xf32> to vector<1x256xf32>
    %396 = vector.broadcast %393 : vector<8x1xf32> to vector<8x256xf32>
    %397 = vector.broadcast %395 : vector<1x256xf32> to vector<8x256xf32>
    %398 = arith.mulf %396, %397 : vector<8x256xf32>
    %399 = arith.addf %391, %398 : vector<8x256xf32>
    %c13_264 = arith.constant 13 : index
    %c0_265 = arith.constant 0 : index
    %c0_266 = arith.constant 0 : index
    %400 = vector.load %arg1[%c13_264, %c0_265, %c0_266] : memref<36x8x1xf32, #tpu.memory_space<vmem>>, vector<1x8x1xf32>
    %401 = vector.shape_cast %400 : vector<1x8x1xf32> to vector<8x1xf32>
    %c1_267 = arith.constant 1 : index
    %c13_268 = arith.constant 13 : index
    %c0_269 = arith.constant 0 : index
    %402 = vector.load %arg0[%c1_267, %c13_268, %c0_269] : memref<2x36x256xf32, #tpu.memory_space<vmem>>, vector<1x1x256xf32>
    %403 = vector.shape_cast %402 : vector<1x1x256xf32> to vector<1x256xf32>
    %404 = vector.broadcast %401 : vector<8x1xf32> to vector<8x256xf32>
    %405 = vector.broadcast %403 : vector<1x256xf32> to vector<8x256xf32>
    %406 = arith.mulf %404, %405 : vector<8x256xf32>
    %407 = arith.addf %399, %406 : vector<8x256xf32>
    %c14_270 = arith.constant 14 : index
    %c0_271 = arith.constant 0 : index
    %c0_272 = arith.constant 0 : index
    %408 = vector.load %arg1[%c14_270, %c0_271, %c0_272] : memref<36x8x1xf32, #tpu.memory_space<vmem>>, vector<1x8x1xf32>
    %409 = vector.shape_cast %408 : vector<1x8x1xf32> to vector<8x1xf32>
    %c1_273 = arith.constant 1 : index
    %c14_274 = arith.constant 14 : index
    %c0_275 = arith.constant 0 : index
    %410 = vector.load %arg0[%c1_273, %c14_274, %c0_275] : memref<2x36x256xf32, #tpu.memory_space<vmem>>, vector<1x1x256xf32>
    %411 = vector.shape_cast %410 : vector<1x1x256xf32> to vector<1x256xf32>
    %412 = vector.broadcast %409 : vector<8x1xf32> to vector<8x256xf32>
    %413 = vector.broadcast %411 : vector<1x256xf32> to vector<8x256xf32>
    %414 = arith.mulf %412, %413 : vector<8x256xf32>
    %415 = arith.addf %407, %414 : vector<8x256xf32>
    %c15_276 = arith.constant 15 : index
    %c0_277 = arith.constant 0 : index
    %c0_278 = arith.constant 0 : index
    %416 = vector.load %arg1[%c15_276, %c0_277, %c0_278] : memref<36x8x1xf32, #tpu.memory_space<vmem>>, vector<1x8x1xf32>
    %417 = vector.shape_cast %416 : vector<1x8x1xf32> to vector<8x1xf32>
    %c1_279 = arith.constant 1 : index
    %c15_280 = arith.constant 15 : index
    %c0_281 = arith.constant 0 : index
    %418 = vector.load %arg0[%c1_279, %c15_280, %c0_281] : memref<2x36x256xf32, #tpu.memory_space<vmem>>, vector<1x1x256xf32>
    %419 = vector.shape_cast %418 : vector<1x1x256xf32> to vector<1x256xf32>
    %420 = vector.broadcast %417 : vector<8x1xf32> to vector<8x256xf32>
    %421 = vector.broadcast %419 : vector<1x256xf32> to vector<8x256xf32>
    %422 = arith.mulf %420, %421 : vector<8x256xf32>
    %423 = arith.addf %415, %422 : vector<8x256xf32>
    %c16_282 = arith.constant 16 : index
    %c0_283 = arith.constant 0 : index
    %c0_284 = arith.constant 0 : index
    %424 = vector.load %arg1[%c16_282, %c0_283, %c0_284] : memref<36x8x1xf32, #tpu.memory_space<vmem>>, vector<1x8x1xf32>
    %425 = vector.shape_cast %424 : vector<1x8x1xf32> to vector<8x1xf32>
    %c1_285 = arith.constant 1 : index
    %c16_286 = arith.constant 16 : index
    %c0_287 = arith.constant 0 : index
    %426 = vector.load %arg0[%c1_285, %c16_286, %c0_287] : memref<2x36x256xf32, #tpu.memory_space<vmem>>, vector<1x1x256xf32>
    %427 = vector.shape_cast %426 : vector<1x1x256xf32> to vector<1x256xf32>
    %428 = vector.broadcast %425 : vector<8x1xf32> to vector<8x256xf32>
    %429 = vector.broadcast %427 : vector<1x256xf32> to vector<8x256xf32>
    %430 = arith.mulf %428, %429 : vector<8x256xf32>
    %431 = arith.addf %423, %430 : vector<8x256xf32>
    %c17_288 = arith.constant 17 : index
    %c0_289 = arith.constant 0 : index
    %c0_290 = arith.constant 0 : index
    %432 = vector.load %arg1[%c17_288, %c0_289, %c0_290] : memref<36x8x1xf32, #tpu.memory_space<vmem>>, vector<1x8x1xf32>
    %433 = vector.shape_cast %432 : vector<1x8x1xf32> to vector<8x1xf32>
    %c1_291 = arith.constant 1 : index
    %c17_292 = arith.constant 17 : index
    %c0_293 = arith.constant 0 : index
    %434 = vector.load %arg0[%c1_291, %c17_292, %c0_293] : memref<2x36x256xf32, #tpu.memory_space<vmem>>, vector<1x1x256xf32>
    %435 = vector.shape_cast %434 : vector<1x1x256xf32> to vector<1x256xf32>
    %436 = vector.broadcast %433 : vector<8x1xf32> to vector<8x256xf32>
    %437 = vector.broadcast %435 : vector<1x256xf32> to vector<8x256xf32>
    %438 = arith.mulf %436, %437 : vector<8x256xf32>
    %439 = arith.addf %431, %438 : vector<8x256xf32>
    %c18_294 = arith.constant 18 : index
    %c0_295 = arith.constant 0 : index
    %c0_296 = arith.constant 0 : index
    %440 = vector.load %arg1[%c18_294, %c0_295, %c0_296] : memref<36x8x1xf32, #tpu.memory_space<vmem>>, vector<1x8x1xf32>
    %441 = vector.shape_cast %440 : vector<1x8x1xf32> to vector<8x1xf32>
    %c1_297 = arith.constant 1 : index
    %c18_298 = arith.constant 18 : index
    %c0_299 = arith.constant 0 : index
    %442 = vector.load %arg0[%c1_297, %c18_298, %c0_299] : memref<2x36x256xf32, #tpu.memory_space<vmem>>, vector<1x1x256xf32>
    %443 = vector.shape_cast %442 : vector<1x1x256xf32> to vector<1x256xf32>
    %444 = vector.broadcast %441 : vector<8x1xf32> to vector<8x256xf32>
    %445 = vector.broadcast %443 : vector<1x256xf32> to vector<8x256xf32>
    %446 = arith.mulf %444, %445 : vector<8x256xf32>
    %447 = arith.addf %439, %446 : vector<8x256xf32>
    %c19_300 = arith.constant 19 : index
    %c0_301 = arith.constant 0 : index
    %c0_302 = arith.constant 0 : index
    %448 = vector.load %arg1[%c19_300, %c0_301, %c0_302] : memref<36x8x1xf32, #tpu.memory_space<vmem>>, vector<1x8x1xf32>
    %449 = vector.shape_cast %448 : vector<1x8x1xf32> to vector<8x1xf32>
    %c1_303 = arith.constant 1 : index
    %c19_304 = arith.constant 19 : index
    %c0_305 = arith.constant 0 : index
    %450 = vector.load %arg0[%c1_303, %c19_304, %c0_305] : memref<2x36x256xf32, #tpu.memory_space<vmem>>, vector<1x1x256xf32>
    %451 = vector.shape_cast %450 : vector<1x1x256xf32> to vector<1x256xf32>
    %452 = vector.broadcast %449 : vector<8x1xf32> to vector<8x256xf32>
    %453 = vector.broadcast %451 : vector<1x256xf32> to vector<8x256xf32>
    %454 = arith.mulf %452, %453 : vector<8x256xf32>
    %455 = arith.addf %447, %454 : vector<8x256xf32>
    %c20_306 = arith.constant 20 : index
    %c0_307 = arith.constant 0 : index
    %c0_308 = arith.constant 0 : index
    %456 = vector.load %arg1[%c20_306, %c0_307, %c0_308] : memref<36x8x1xf32, #tpu.memory_space<vmem>>, vector<1x8x1xf32>
    %457 = vector.shape_cast %456 : vector<1x8x1xf32> to vector<8x1xf32>
    %c1_309 = arith.constant 1 : index
    %c20_310 = arith.constant 20 : index
    %c0_311 = arith.constant 0 : index
    %458 = vector.load %arg0[%c1_309, %c20_310, %c0_311] : memref<2x36x256xf32, #tpu.memory_space<vmem>>, vector<1x1x256xf32>
    %459 = vector.shape_cast %458 : vector<1x1x256xf32> to vector<1x256xf32>
    %460 = vector.broadcast %457 : vector<8x1xf32> to vector<8x256xf32>
    %461 = vector.broadcast %459 : vector<1x256xf32> to vector<8x256xf32>
    %462 = arith.mulf %460, %461 : vector<8x256xf32>
    %463 = arith.addf %455, %462 : vector<8x256xf32>
    %c21_312 = arith.constant 21 : index
    %c0_313 = arith.constant 0 : index
    %c0_314 = arith.constant 0 : index
    %464 = vector.load %arg1[%c21_312, %c0_313, %c0_314] : memref<36x8x1xf32, #tpu.memory_space<vmem>>, vector<1x8x1xf32>
    %465 = vector.shape_cast %464 : vector<1x8x1xf32> to vector<8x1xf32>
    %c1_315 = arith.constant 1 : index
    %c21_316 = arith.constant 21 : index
    %c0_317 = arith.constant 0 : index
    %466 = vector.load %arg0[%c1_315, %c21_316, %c0_317] : memref<2x36x256xf32, #tpu.memory_space<vmem>>, vector<1x1x256xf32>
    %467 = vector.shape_cast %466 : vector<1x1x256xf32> to vector<1x256xf32>
    %468 = vector.broadcast %465 : vector<8x1xf32> to vector<8x256xf32>
    %469 = vector.broadcast %467 : vector<1x256xf32> to vector<8x256xf32>
    %470 = arith.mulf %468, %469 : vector<8x256xf32>
    %471 = arith.addf %463, %470 : vector<8x256xf32>
    %c22_318 = arith.constant 22 : index
    %c0_319 = arith.constant 0 : index
    %c0_320 = arith.constant 0 : index
    %472 = vector.load %arg1[%c22_318, %c0_319, %c0_320] : memref<36x8x1xf32, #tpu.memory_space<vmem>>, vector<1x8x1xf32>
    %473 = vector.shape_cast %472 : vector<1x8x1xf32> to vector<8x1xf32>
    %c1_321 = arith.constant 1 : index
    %c22_322 = arith.constant 22 : index
    %c0_323 = arith.constant 0 : index
    %474 = vector.load %arg0[%c1_321, %c22_322, %c0_323] : memref<2x36x256xf32, #tpu.memory_space<vmem>>, vector<1x1x256xf32>
    %475 = vector.shape_cast %474 : vector<1x1x256xf32> to vector<1x256xf32>
    %476 = vector.broadcast %473 : vector<8x1xf32> to vector<8x256xf32>
    %477 = vector.broadcast %475 : vector<1x256xf32> to vector<8x256xf32>
    %478 = arith.mulf %476, %477 : vector<8x256xf32>
    %479 = arith.addf %471, %478 : vector<8x256xf32>
    %c23_324 = arith.constant 23 : index
    %c0_325 = arith.constant 0 : index
    %c0_326 = arith.constant 0 : index
    %480 = vector.load %arg1[%c23_324, %c0_325, %c0_326] : memref<36x8x1xf32, #tpu.memory_space<vmem>>, vector<1x8x1xf32>
    %481 = vector.shape_cast %480 : vector<1x8x1xf32> to vector<8x1xf32>
    %c1_327 = arith.constant 1 : index
    %c23_328 = arith.constant 23 : index
    %c0_329 = arith.constant 0 : index
    %482 = vector.load %arg0[%c1_327, %c23_328, %c0_329] : memref<2x36x256xf32, #tpu.memory_space<vmem>>, vector<1x1x256xf32>
    %483 = vector.shape_cast %482 : vector<1x1x256xf32> to vector<1x256xf32>
    %484 = vector.broadcast %481 : vector<8x1xf32> to vector<8x256xf32>
    %485 = vector.broadcast %483 : vector<1x256xf32> to vector<8x256xf32>
    %486 = arith.mulf %484, %485 : vector<8x256xf32>
    %487 = arith.addf %479, %486 : vector<8x256xf32>
    %c24_330 = arith.constant 24 : index
    %c0_331 = arith.constant 0 : index
    %c0_332 = arith.constant 0 : index
    %488 = vector.load %arg1[%c24_330, %c0_331, %c0_332] : memref<36x8x1xf32, #tpu.memory_space<vmem>>, vector<1x8x1xf32>
    %489 = vector.shape_cast %488 : vector<1x8x1xf32> to vector<8x1xf32>
    %c1_333 = arith.constant 1 : index
    %c24_334 = arith.constant 24 : index
    %c0_335 = arith.constant 0 : index
    %490 = vector.load %arg0[%c1_333, %c24_334, %c0_335] : memref<2x36x256xf32, #tpu.memory_space<vmem>>, vector<1x1x256xf32>
    %491 = vector.shape_cast %490 : vector<1x1x256xf32> to vector<1x256xf32>
    %492 = vector.broadcast %489 : vector<8x1xf32> to vector<8x256xf32>
    %493 = vector.broadcast %491 : vector<1x256xf32> to vector<8x256xf32>
    %494 = arith.mulf %492, %493 : vector<8x256xf32>
    %495 = arith.addf %487, %494 : vector<8x256xf32>
    %c25_336 = arith.constant 25 : index
    %c0_337 = arith.constant 0 : index
    %c0_338 = arith.constant 0 : index
    %496 = vector.load %arg1[%c25_336, %c0_337, %c0_338] : memref<36x8x1xf32, #tpu.memory_space<vmem>>, vector<1x8x1xf32>
    %497 = vector.shape_cast %496 : vector<1x8x1xf32> to vector<8x1xf32>
    %c1_339 = arith.constant 1 : index
    %c25_340 = arith.constant 25 : index
    %c0_341 = arith.constant 0 : index
    %498 = vector.load %arg0[%c1_339, %c25_340, %c0_341] : memref<2x36x256xf32, #tpu.memory_space<vmem>>, vector<1x1x256xf32>
    %499 = vector.shape_cast %498 : vector<1x1x256xf32> to vector<1x256xf32>
    %500 = vector.broadcast %497 : vector<8x1xf32> to vector<8x256xf32>
    %501 = vector.broadcast %499 : vector<1x256xf32> to vector<8x256xf32>
    %502 = arith.mulf %500, %501 : vector<8x256xf32>
    %503 = arith.addf %495, %502 : vector<8x256xf32>
    %c26_342 = arith.constant 26 : index
    %c0_343 = arith.constant 0 : index
    %c0_344 = arith.constant 0 : index
    %504 = vector.load %arg1[%c26_342, %c0_343, %c0_344] : memref<36x8x1xf32, #tpu.memory_space<vmem>>, vector<1x8x1xf32>
    %505 = vector.shape_cast %504 : vector<1x8x1xf32> to vector<8x1xf32>
    %c1_345 = arith.constant 1 : index
    %c26_346 = arith.constant 26 : index
    %c0_347 = arith.constant 0 : index
    %506 = vector.load %arg0[%c1_345, %c26_346, %c0_347] : memref<2x36x256xf32, #tpu.memory_space<vmem>>, vector<1x1x256xf32>
    %507 = vector.shape_cast %506 : vector<1x1x256xf32> to vector<1x256xf32>
    %508 = vector.broadcast %505 : vector<8x1xf32> to vector<8x256xf32>
    %509 = vector.broadcast %507 : vector<1x256xf32> to vector<8x256xf32>
    %510 = arith.mulf %508, %509 : vector<8x256xf32>
    %511 = arith.addf %503, %510 : vector<8x256xf32>
    %c27_348 = arith.constant 27 : index
    %c0_349 = arith.constant 0 : index
    %c0_350 = arith.constant 0 : index
    %512 = vector.load %arg1[%c27_348, %c0_349, %c0_350] : memref<36x8x1xf32, #tpu.memory_space<vmem>>, vector<1x8x1xf32>
    %513 = vector.shape_cast %512 : vector<1x8x1xf32> to vector<8x1xf32>
    %c1_351 = arith.constant 1 : index
    %c27_352 = arith.constant 27 : index
    %c0_353 = arith.constant 0 : index
    %514 = vector.load %arg0[%c1_351, %c27_352, %c0_353] : memref<2x36x256xf32, #tpu.memory_space<vmem>>, vector<1x1x256xf32>
    %515 = vector.shape_cast %514 : vector<1x1x256xf32> to vector<1x256xf32>
    %516 = vector.broadcast %513 : vector<8x1xf32> to vector<8x256xf32>
    %517 = vector.broadcast %515 : vector<1x256xf32> to vector<8x256xf32>
    %518 = arith.mulf %516, %517 : vector<8x256xf32>
    %519 = arith.addf %511, %518 : vector<8x256xf32>
    %c28_354 = arith.constant 28 : index
    %c0_355 = arith.constant 0 : index
    %c0_356 = arith.constant 0 : index
    %520 = vector.load %arg1[%c28_354, %c0_355, %c0_356] : memref<36x8x1xf32, #tpu.memory_space<vmem>>, vector<1x8x1xf32>
    %521 = vector.shape_cast %520 : vector<1x8x1xf32> to vector<8x1xf32>
    %c1_357 = arith.constant 1 : index
    %c28_358 = arith.constant 28 : index
    %c0_359 = arith.constant 0 : index
    %522 = vector.load %arg0[%c1_357, %c28_358, %c0_359] : memref<2x36x256xf32, #tpu.memory_space<vmem>>, vector<1x1x256xf32>
    %523 = vector.shape_cast %522 : vector<1x1x256xf32> to vector<1x256xf32>
    %524 = vector.broadcast %521 : vector<8x1xf32> to vector<8x256xf32>
    %525 = vector.broadcast %523 : vector<1x256xf32> to vector<8x256xf32>
    %526 = arith.mulf %524, %525 : vector<8x256xf32>
    %527 = arith.addf %519, %526 : vector<8x256xf32>
    %c29_360 = arith.constant 29 : index
    %c0_361 = arith.constant 0 : index
    %c0_362 = arith.constant 0 : index
    %528 = vector.load %arg1[%c29_360, %c0_361, %c0_362] : memref<36x8x1xf32, #tpu.memory_space<vmem>>, vector<1x8x1xf32>
    %529 = vector.shape_cast %528 : vector<1x8x1xf32> to vector<8x1xf32>
    %c1_363 = arith.constant 1 : index
    %c29_364 = arith.constant 29 : index
    %c0_365 = arith.constant 0 : index
    %530 = vector.load %arg0[%c1_363, %c29_364, %c0_365] : memref<2x36x256xf32, #tpu.memory_space<vmem>>, vector<1x1x256xf32>
    %531 = vector.shape_cast %530 : vector<1x1x256xf32> to vector<1x256xf32>
    %532 = vector.broadcast %529 : vector<8x1xf32> to vector<8x256xf32>
    %533 = vector.broadcast %531 : vector<1x256xf32> to vector<8x256xf32>
    %534 = arith.mulf %532, %533 : vector<8x256xf32>
    %535 = arith.addf %527, %534 : vector<8x256xf32>
    %c30_366 = arith.constant 30 : index
    %c0_367 = arith.constant 0 : index
    %c0_368 = arith.constant 0 : index
    %536 = vector.load %arg1[%c30_366, %c0_367, %c0_368] : memref<36x8x1xf32, #tpu.memory_space<vmem>>, vector<1x8x1xf32>
    %537 = vector.shape_cast %536 : vector<1x8x1xf32> to vector<8x1xf32>
    %c1_369 = arith.constant 1 : index
    %c30_370 = arith.constant 30 : index
    %c0_371 = arith.constant 0 : index
    %538 = vector.load %arg0[%c1_369, %c30_370, %c0_371] : memref<2x36x256xf32, #tpu.memory_space<vmem>>, vector<1x1x256xf32>
    %539 = vector.shape_cast %538 : vector<1x1x256xf32> to vector<1x256xf32>
    %540 = vector.broadcast %537 : vector<8x1xf32> to vector<8x256xf32>
    %541 = vector.broadcast %539 : vector<1x256xf32> to vector<8x256xf32>
    %542 = arith.mulf %540, %541 : vector<8x256xf32>
    %543 = arith.addf %535, %542 : vector<8x256xf32>
    %c31_372 = arith.constant 31 : index
    %c0_373 = arith.constant 0 : index
    %c0_374 = arith.constant 0 : index
    %544 = vector.load %arg1[%c31_372, %c0_373, %c0_374] : memref<36x8x1xf32, #tpu.memory_space<vmem>>, vector<1x8x1xf32>
    %545 = vector.shape_cast %544 : vector<1x8x1xf32> to vector<8x1xf32>
    %c1_375 = arith.constant 1 : index
    %c31_376 = arith.constant 31 : index
    %c0_377 = arith.constant 0 : index
    %546 = vector.load %arg0[%c1_375, %c31_376, %c0_377] : memref<2x36x256xf32, #tpu.memory_space<vmem>>, vector<1x1x256xf32>
    %547 = vector.shape_cast %546 : vector<1x1x256xf32> to vector<1x256xf32>
    %548 = vector.broadcast %545 : vector<8x1xf32> to vector<8x256xf32>
    %549 = vector.broadcast %547 : vector<1x256xf32> to vector<8x256xf32>
    %550 = arith.mulf %548, %549 : vector<8x256xf32>
    %551 = arith.addf %543, %550 : vector<8x256xf32>
    %c32_378 = arith.constant 32 : index
    %c0_379 = arith.constant 0 : index
    %c0_380 = arith.constant 0 : index
    %552 = vector.load %arg1[%c32_378, %c0_379, %c0_380] : memref<36x8x1xf32, #tpu.memory_space<vmem>>, vector<1x8x1xf32>
    %553 = vector.shape_cast %552 : vector<1x8x1xf32> to vector<8x1xf32>
    %c1_381 = arith.constant 1 : index
    %c32_382 = arith.constant 32 : index
    %c0_383 = arith.constant 0 : index
    %554 = vector.load %arg0[%c1_381, %c32_382, %c0_383] : memref<2x36x256xf32, #tpu.memory_space<vmem>>, vector<1x1x256xf32>
    %555 = vector.shape_cast %554 : vector<1x1x256xf32> to vector<1x256xf32>
    %556 = vector.broadcast %553 : vector<8x1xf32> to vector<8x256xf32>
    %557 = vector.broadcast %555 : vector<1x256xf32> to vector<8x256xf32>
    %558 = arith.mulf %556, %557 : vector<8x256xf32>
    %559 = arith.addf %551, %558 : vector<8x256xf32>
    %c33_384 = arith.constant 33 : index
    %c0_385 = arith.constant 0 : index
    %c0_386 = arith.constant 0 : index
    %560 = vector.load %arg1[%c33_384, %c0_385, %c0_386] : memref<36x8x1xf32, #tpu.memory_space<vmem>>, vector<1x8x1xf32>
    %561 = vector.shape_cast %560 : vector<1x8x1xf32> to vector<8x1xf32>
    %c1_387 = arith.constant 1 : index
    %c33_388 = arith.constant 33 : index
    %c0_389 = arith.constant 0 : index
    %562 = vector.load %arg0[%c1_387, %c33_388, %c0_389] : memref<2x36x256xf32, #tpu.memory_space<vmem>>, vector<1x1x256xf32>
    %563 = vector.shape_cast %562 : vector<1x1x256xf32> to vector<1x256xf32>
    %564 = vector.broadcast %561 : vector<8x1xf32> to vector<8x256xf32>
    %565 = vector.broadcast %563 : vector<1x256xf32> to vector<8x256xf32>
    %566 = arith.mulf %564, %565 : vector<8x256xf32>
    %567 = arith.addf %559, %566 : vector<8x256xf32>
    %c34_390 = arith.constant 34 : index
    %c0_391 = arith.constant 0 : index
    %c0_392 = arith.constant 0 : index
    %568 = vector.load %arg1[%c34_390, %c0_391, %c0_392] : memref<36x8x1xf32, #tpu.memory_space<vmem>>, vector<1x8x1xf32>
    %569 = vector.shape_cast %568 : vector<1x8x1xf32> to vector<8x1xf32>
    %c1_393 = arith.constant 1 : index
    %c34_394 = arith.constant 34 : index
    %c0_395 = arith.constant 0 : index
    %570 = vector.load %arg0[%c1_393, %c34_394, %c0_395] : memref<2x36x256xf32, #tpu.memory_space<vmem>>, vector<1x1x256xf32>
    %571 = vector.shape_cast %570 : vector<1x1x256xf32> to vector<1x256xf32>
    %572 = vector.broadcast %569 : vector<8x1xf32> to vector<8x256xf32>
    %573 = vector.broadcast %571 : vector<1x256xf32> to vector<8x256xf32>
    %574 = arith.mulf %572, %573 : vector<8x256xf32>
    %575 = arith.addf %567, %574 : vector<8x256xf32>
    %c35_396 = arith.constant 35 : index
    %c0_397 = arith.constant 0 : index
    %c0_398 = arith.constant 0 : index
    %576 = vector.load %arg1[%c35_396, %c0_397, %c0_398] : memref<36x8x1xf32, #tpu.memory_space<vmem>>, vector<1x8x1xf32>
    %577 = vector.shape_cast %576 : vector<1x8x1xf32> to vector<8x1xf32>
    %c1_399 = arith.constant 1 : index
    %c35_400 = arith.constant 35 : index
    %c0_401 = arith.constant 0 : index
    %578 = vector.load %arg0[%c1_399, %c35_400, %c0_401] : memref<2x36x256xf32, #tpu.memory_space<vmem>>, vector<1x1x256xf32>
    %579 = vector.shape_cast %578 : vector<1x1x256xf32> to vector<1x256xf32>
    %580 = vector.broadcast %577 : vector<8x1xf32> to vector<8x256xf32>
    %581 = vector.broadcast %579 : vector<1x256xf32> to vector<8x256xf32>
    %582 = arith.mulf %580, %581 : vector<8x256xf32>
    %583 = arith.addf %575, %582 : vector<8x256xf32>
    %584 = vector.broadcast %0 : vector<8x1xf32> to vector<8x256xf32>
    %585 = arith.addf %583, %584 : vector<8x256xf32>
    %c1_402 = arith.constant 1 : index
    %c0_403 = arith.constant 0 : index
    %c0_404 = arith.constant 0 : index
    %586 = vector.load %arg3[%c1_402, %c0_403, %c0_404] : memref<2x8x256xf32, #tpu.memory_space<vmem>>, vector<1x8x256xf32>
    %587 = vector.shape_cast %586 : vector<1x8x256xf32> to vector<8x256xf32>
    %588 = vector.shape_cast %585 : vector<8x256xf32> to vector<1x8x256xf32>
    tpu.vector_store %arg3[%c1_402, %c0_403, %c0_404], %588 {strides = array<i32>} : memref<2x8x256xf32, #tpu.memory_space<vmem>>, vector<1x8x256xf32>,
    return
  }
}

</mosaic_0001>

<llo_original>
// kernel: tpu_custom_call.1
$region0: #{tpu_custom_call.1}
  #allocation0 [shape = 'u32[]', space=smem, size = 0x4, offset = 0x4, fixed_abs, tag = 'smem constant byte address 0x4 - core index']
  #allocation1 [shape = 'u32[144,128]{1,0:T(1,128)}', space=vmem, size = 0x12000, scoped, tag = 'internal scratch']
  %s0 = inlined_call_operand.vmem [shape: f32[2,36,256], index: 0, kind: input, shape index: {}]
  %s1 = inlined_call_operand.vmem [shape: f32[36,8,1], index: 1, kind: input, shape index: {}]
  %s2 = inlined_call_operand.vmem [shape: f32[8,1], index: 2, kind: input, shape index: {}]
  %s3 = inlined_call_operand.hbm [shape: f32[2,8,256], index: 3, kind: output, shape index: {}]
  %s4 = sld [smem:[#allocation0]]
  $region22: #{tpu_custom_call.1} parent=0
    _
  %s6 = ssub.s32 1, %s4
  %s7 = scalar_select 0, %s6, %s4
  $region1: #{tpu_custom_call.1} parent=0
    #allocation2 [shape = 'u8[16384]{0}', space=vmem, size = 0x4000, scoped, tag = 'output window, operand 0, single buffered']
    #allocation3 [shape = 's32[1]{0}', space=sflag, size = 0x4, scoped, tag = 'scoped memory for tpu_custom_call.1']
    %8 = vsyncpa [#allocation3], 0
    // Predicated region
    $region2: #{tpu_custom_call.1} parent=1 // pred_check
      _
    $region3: #{tpu_custom_call.1} parent=1 // pred_check_branch
      %10 = sbr.rel (0) target = $region5
    $region4: #{tpu_custom_call.1} parent=1 // pred_region
      _
    $region5: #{tpu_custom_call.1} parent=1 // pred_fallthru
      _
    // Predicated region
    $region6: #{tpu_custom_call.1} parent=1 // pred_check
      _
    $region7: #{tpu_custom_call.1} parent=1 // pred_check_branch
      %12 = sbr.rel (0) target = $region9
    $region8: #{tpu_custom_call.1} parent=1 // pred_region
      _
    $region9: #{tpu_custom_call.1} parent=1 // pred_fallthru
      _
    // Predicated region
    $region10: #{tpu_custom_call.1} parent=1 // pred_check
      _
    $region11: #{tpu_custom_call.1} parent=1 // pred_check_branch
      %14 = sbr.rel (0) target = $region13
    $region12: #{tpu_custom_call.1} parent=1 // pred_region
      _
    $region13: #{tpu_custom_call.1} parent=1 // pred_fallthru
      _
    %v15 = vld [vmem:[%s2] sm:$0xff]
    %v16 = vld [vmem:[%s1] sm:$0xff]
    %v17 = vld [vmem:[%s0] ss:$8 sm:$0x3]
    %19 = vset.pattern.permute.xlu0 0
    %20 = vperm.xlu0 %19, %v16
    %v21 = vpop.permute.xlu0 %20
    %v24 = vlaneseq
    %v25 = vshrl.u32 %v24, 7
    %v26 = vsub.s32 0, %v25
    %v27 = vrot.slane %v17, %v26
    %v28 = vlaneseq
    %v29 = vshrl.u32 %v28, 7
    %v30 = vsub.s32 1, %v29
    %v31 = vrot.slane %v17, %v30
    %v34 = vmul.f32 %v21, %v27
    %v35 = vmul.f32 %v21, %v31
    %v36 = vadd.f32 %v34, 0.0
    %v37 = vadd.f32 %v35, 0.0
    %s38 = scalar_lea.vmem %s1, 8
    %v39 = vld [vmem:[%s38] sm:$0xff]
    %s40 = scalar_lea.vmem %s0, 1
    %v41 = vld [vmem:[%s40] ss:$8 sm:$0x3]
    %43 = vset.pattern.permute.xlu0 0
    %44 = vperm.xlu0 %43, %v39
    %v45 = vpop.permute.xlu0 %44
    %v48 = vlaneseq
    %v49 = vshrl.u32 %v48, 7
    %v50 = vsub.s32 0, %v49
    %v51 = vrot.slane %v41, %v50
    %v52 = vlaneseq
    %v53 = vshrl.u32 %v52, 7
    %v54 = vsub.s32 1, %v53
    %v55 = vrot.slane %v41, %v54
    %v58 = vmul.f32 %v45, %v51
    %v59 = vmul.f32 %v45, %v55
    %v60 = vadd.f32 %v36, %v58
    %v61 = vadd.f32 %v37, %v59
    %s62 = scalar_lea.vmem %s1, 16
    %v63 = vld [vmem:[%s62] sm:$0xff]
    %s64 = scalar_lea.vmem %s0, 2
    %v65 = vld [vmem:[%s64] ss:$8 sm:$0x3]
    %67 = vset.pattern.permute.xlu0 0
    %68 = vperm.xlu0 %67, %v63
    %v69 = vpop.permute.xlu0 %68
    %v72 = vlaneseq
    %v73 = vshrl.u32 %v72, 7
    %v74 = vsub.s32 0, %v73
    %v75 = vrot.slane %v65, %v74
    %v76 = vlaneseq
    %v77 = vshrl.u32 %v76, 7
    %v78 = vsub.s32 1, %v77
    %v79 = vrot.slane %v65, %v78
    %v82 = vmul.f32 %v69, %v75
    %v83 = vmul.f32 %v69, %v79
    %v84 = vadd.f32 %v60, %v82
    %v85 = vadd.f32 %v61, %v83
    %s86 = scalar_lea.vmem %s1, 24
    %v87 = vld [vmem:[%s86] sm:$0xff]
    %s88 = scalar_lea.vmem %s0, 3
    %v89 = vld [vmem:[%s88] ss:$8 sm:$0x3]
    %91 = vset.pattern.permute.xlu0 0
    %92 = vperm.xlu0 %91, %v87
    %v93 = vpop.permute.xlu0 %92
    %v96 = vlaneseq
    %v97 = vshrl.u32 %v96, 7
    %v98 = vsub.s32 0, %v97
    %v99 = vrot.slane %v89, %v98
    %v100 = vlaneseq
    %v101 = vshrl.u32 %v100, 7
    %v102 = vsub.s32 1, %v101
    %v103 = vrot.slane %v89, %v102
    %v106 = vmul.f32 %v93, %v99
    %v107 = vmul.f32 %v93, %v103
    %v108 = vadd.f32 %v84, %v106
    %v109 = vadd.f32 %v85, %v107
    %s110 = scalar_lea.vmem %s1, 32
    %v111 = vld [vmem:[%s110] sm:$0xff]
    %s112 = scalar_lea.vmem %s0, 4
    %v113 = vld [vmem:[%s112] ss:$8 sm:$0x3]
    %115 = vset.pattern.permute.xlu0 0
    %116 = vperm.xlu0 %115, %v111
    %v117 = vpop.permute.xlu0 %116
    %v120 = vlaneseq
    %v121 = vshrl.u32 %v120, 7
    %v122 = vsub.s32 0, %v121
    %v123 = vrot.slane %v113, %v122
    %v124 = vlaneseq
    %v125 = vshrl.u32 %v124, 7
    %v126 = vsub.s32 1, %v125
    %v127 = vrot.slane %v113, %v126
    %v130 = vmul.f32 %v117, %v123
    %v131 = vmul.f32 %v117, %v127
    %v132 = vadd.f32 %v108, %v130
    %v133 = vadd.f32 %v109, %v131
    %s134 = scalar_lea.vmem %s1, 40
    %v135 = vld [vmem:[%s134] sm:$0xff]
    %s136 = scalar_lea.vmem %s0, 5
    %v137 = vld [vmem:[%s136] ss:$8 sm:$0x3]
    %139 = vset.pattern.permute.xlu0 0
    %140 = vperm.xlu0 %139, %v135
    %v141 = vpop.permute.xlu0 %140
    %v144 = vlaneseq
    %v145 = vshrl.u32 %v144, 7
    %v146 = vsub.s32 0, %v145
    %v147 = vrot.slane %v137, %v146
    %v148 = vlaneseq
    %v149 = vshrl.u32 %v148, 7
    %v150 = vsub.s32 1, %v149
    %v151 = vrot.slane %v137, %v150
    %v154 = vmul.f32 %v141, %v147
    %v155 = vmul.f32 %v141, %v151
    %v156 = vadd.f32 %v132, %v154
    %v157 = vadd.f32 %v133, %v155
    %s158 = scalar_lea.vmem %s1, 48
    %v159 = vld [vmem:[%s158] sm:$0xff]
    %s160 = scalar_lea.vmem %s0, 6
    %v161 = vld [vmem:[%s160] ss:$8 sm:$0x3]
    %163 = vset.pattern.permute.xlu0 0
    %164 = vperm.xlu0 %163, %v159
    %v165 = vpop.permute.xlu0 %164
    %v168 = vlaneseq
    %v169 = vshrl.u32 %v168, 7
    %v170 = vsub.s32 0, %v169
    %v171 = vrot.slane %v161, %v170
    %v172 = vlaneseq
    %v173 = vshrl.u32 %v172, 7
    %v174 = vsub.s32 1, %v173
    %v175 = vrot.slane %v161, %v174
    %v178 = vmul.f32 %v165, %v171
    %v179 = vmul.f32 %v165, %v175
    %v180 = vadd.f32 %v156, %v178
    %v181 = vadd.f32 %v157, %v179
    %s182 = scalar_lea.vmem %s1, 56
    %v183 = vld [vmem:[%s182] sm:$0xff]
    %s184 = scalar_lea.vmem %s0, 7
    %v185 = vld [vmem:[%s184] ss:$8 sm:$0x3]
    %187 = vset.pattern.permute.xlu0 0
    %188 = vperm.xlu0 %187, %v183
    %v189 = vpop.permute.xlu0 %188
    %v192 = vlaneseq
    %v193 = vshrl.u32 %v192, 7
    %v194 = vsub.s32 0, %v193
    %v195 = vrot.slane %v185, %v194
    %v196 = vlaneseq
    %v197 = vshrl.u32 %v196, 7
    %v198 = vsub.s32 1, %v197
    %v199 = vrot.slane %v185, %v198
    %v202 = vmul.f32 %v189, %v195
    %v203 = vmul.f32 %v189, %v199
    %v204 = vadd.f32 %v180, %v202
    %v205 = vadd.f32 %v181, %v203
    %s206 = scalar_lea.vmem %s1, 64
    %v207 = vld [vmem:[%s206] sm:$0xff]
    %s208 = scalar_lea.vmem %s0, 16
    %v209 = vld [vmem:[%s208] ss:$8 sm:$0x3]
    %211 = vset.pattern.permute.xlu0 0
    %212 = vperm.xlu0 %211, %v207
    %v213 = vpop.permute.xlu0 %212
    %v216 = vlaneseq
    %v217 = vshrl.u32 %v216, 7
    %v218 = vsub.s32 0, %v217
    %v219 = vrot.slane %v209, %v218
    %v220 = vlaneseq
    %v221 = vshrl.u32 %v220, 7
    %v222 = vsub.s32 1, %v221
    %v223 = vrot.slane %v209, %v222
    %v226 = vmul.f32 %v213, %v219
    %v227 = vmul.f32 %v213, %v223
    %v228 = vadd.f32 %v204, %v226
    %v229 = vadd.f32 %v205, %v227
    %s230 = scalar_lea.vmem %s1, 72
    %v231 = vld [vmem:[%s230] sm:$0xff]
    %s232 = scalar_lea.vmem %s0, 17
    %v233 = vld [vmem:[%s232] ss:$8 sm:$0x3]
    %235 = vset.pattern.permute.xlu0 0
    %236 = vperm.xlu0 %235, %v231
    %v237 = vpop.permute.xlu0 %236
    %v240 = vlaneseq
    %v241 = vshrl.u32 %v240, 7
    %v242 = vsub.s32 0, %v241
    %v243 = vrot.slane %v233, %v242
    %v244 = vlaneseq
    %v245 = vshrl.u32 %v244, 7
    %v246 = vsub.s32 1, %v245
    %v247 = vrot.slane %v233, %v246
    %v250 = vmul.f32 %v237, %v243
    %v251 = vmul.f32 %v237, %v247
    %v252 = vadd.f32 %v228, %v250
    %v253 = vadd.f32 %v229, %v251
    %s254 = scalar_lea.vmem %s1, 80
    %v255 = vld [vmem:[%s254] sm:$0xff]
    %s256 = scalar_lea.vmem %s0, 18
    %v257 = vld [vmem:[%s256] ss:$8 sm:$0x3]
    %259 = vset.pattern.permute.xlu0 0
    %260 = vperm.xlu0 %259, %v255
    %v261 = vpop.permute.xlu0 %260
    %v264 = vlaneseq
    %v265 = vshrl.u32 %v264, 7
    %v266 = vsub.s32 0, %v265
    %v267 = vrot.slane %v257, %v266
    %v268 = vlaneseq
    %v269 = vshrl.u32 %v268, 7
    %v270 = vsub.s32 1, %v269
    %v271 = vrot.slane %v257, %v270
    %v274 = vmul.f32 %v261, %v267
    %v275 = vmul.f32 %v261, %v271
    %v276 = vadd.f32 %v252, %v274
    %v277 = vadd.f32 %v253, %v275
    %s278 = scalar_lea.vmem %s1, 88
    %v279 = vld [vmem:[%s278] sm:$0xff]
    %s280 = scalar_lea.vmem %s0, 19
    %v281 = vld [vmem:[%s280] ss:$8 sm:$0x3]
    %283 = vset.pattern.permute.xlu0 0
    %284 = vperm.xlu0 %283, %v279
    %v285 = vpop.permute.xlu0 %284
    %v288 = vlaneseq
    %v289 = vshrl.u32 %v288, 7
    %v290 = vsub.s32 0, %v289
    %v291 = vrot.slane %v281, %v290
    %v292 = vlaneseq
    %v293 = vshrl.u32 %v292, 7
    %v294 = vsub.s32 1, %v293
    %v295 = vrot.slane %v281, %v294
    %v298 = vmul.f32 %v285, %v291
    %v299 = vmul.f32 %v285, %v295
    %v300 = vadd.f32 %v276, %v298
    %v301 = vadd.f32 %v277, %v299
    %s302 = scalar_lea.vmem %s1, 96
    %v303 = vld [vmem:[%s302] sm:$0xff]
    %s304 = scalar_lea.vmem %s0, 20
    %v305 = vld [vmem:[%s304] ss:$8 sm:$0x3]
    %307 = vset.pattern.permute.xlu0 0
    %308 = vperm.xlu0 %307, %v303
    %v309 = vpop.permute.xlu0 %308
    %v312 = vlaneseq
    %v313 = vshrl.u32 %v312, 7
    %v314 = vsub.s32 0, %v313
    %v315 = vrot.slane %v305, %v314
    %v316 = vlaneseq
    %v317 = vshrl.u32 %v316, 7
    %v318 = vsub.s32 1, %v317
    %v319 = vrot.slane %v305, %v318
    %v322 = vmul.f32 %v309, %v315
    %v323 = vmul.f32 %v309, %v319
    %v324 = vadd.f32 %v300, %v322
    %v325 = vadd.f32 %v301, %v323
    %s326 = scalar_lea.vmem %s1, 104
    %v327 = vld [vmem:[%s326] sm:$0xff]
    %s328 = scalar_lea.vmem %s0, 21
    %v329 = vld [vmem:[%s328] ss:$8 sm:$0x3]
    %331 = vset.pattern.permute.xlu0 0
    %332 = vperm.xlu0 %331, %v327
    %v333 = vpop.permute.xlu0 %332
    %v336 = vlaneseq
    %v337 = vshrl.u32 %v336, 7
    %v338 = vsub.s32 0, %v337
    %v339 = vrot.slane %v329, %v338
    %v340 = vlaneseq
    %v341 = vshrl.u32 %v340, 7
    %v342 = vsub.s32 1, %v341
    %v343 = vrot.slane %v329, %v342
    %v346 = vmul.f32 %v333, %v339
    %v347 = vmul.f32 %v333, %v343
    %v348 = vadd.f32 %v324, %v346
    %v349 = vadd.f32 %v325, %v347
    %s350 = scalar_lea.vmem %s1, 112
    %v351 = vld [vmem:[%s350] sm:$0xff]
    %s352 = scalar_lea.vmem %s0, 22
    %v353 = vld [vmem:[%s352] ss:$8 sm:$0x3]
    %355 = vset.pattern.permute.xlu0 0
    %356 = vperm.xlu0 %355, %v351
    %v357 = vpop.permute.xlu0 %356
    %v360 = vlaneseq
    %v361 = vshrl.u32 %v360, 7
    %v362 = vsub.s32 0, %v361
    %v363 = vrot.slane %v353, %v362
    %v364 = vlaneseq
    %v365 = vshrl.u32 %v364, 7
    %v366 = vsub.s32 1, %v365
    %v367 = vrot.slane %v353, %v366
    %v370 = vmul.f32 %v357, %v363
    %v371 = vmul.f32 %v357, %v367
    %v372 = vadd.f32 %v348, %v370
    %v373 = vadd.f32 %v349, %v371
    %s374 = scalar_lea.vmem %s1, 120
    %v375 = vld [vmem:[%s374] sm:$0xff]
    %s376 = scalar_lea.vmem %s0, 23
    %v377 = vld [vmem:[%s376] ss:$8 sm:$0x3]
    %379 = vset.pattern.permute.xlu0 0
    %380 = vperm.xlu0 %379, %v375
    %v381 = vpop.permute.xlu0 %380
    %v384 = vlaneseq
    %v385 = vshrl.u32 %v384, 7
    %v386 = vsub.s32 0, %v385
    %v387 = vrot.slane %v377, %v386
    %v388 = vlaneseq
    %v389 = vshrl.u32 %v388, 7
    %v390 = vsub.s32 1, %v389
    %v391 = vrot.slane %v377, %v390
    %v394 = vmul.f32 %v381, %v387
    %v395 = vmul.f32 %v381, %v391
    %v396 = vadd.f32 %v372, %v394
    %v397 = vadd.f32 %v373, %v395
    %s398 = scalar_lea.vmem %s1, 128
    %v399 = vld [vmem:[%s398] sm:$0xff]
    %s400 = scalar_lea.vmem %s0, 32
    %v401 = vld [vmem:[%s400] ss:$8 sm:$0x3]
    %403 = vset.pattern.permute.xlu0 0
    %404 = vperm.xlu0 %403, %v399
    %v405 = vpop.permute.xlu0 %404
    %v408 = vlaneseq
    %v409 = vshrl.u32 %v408, 7
    %v410 = vsub.s32 0, %v409
    %v411 = vrot.slane %v401, %v410
    %v412 = vlaneseq
    %v413 = vshrl.u32 %v412, 7
    %v414 = vsub.s32 1, %v413
    %v415 = vrot.slane %v401, %v414
    %v418 = vmul.f32 %v405, %v411
    %v419 = vmul.f32 %v405, %v415
    %v420 = vadd.f32 %v396, %v418
    %v421 = vadd.f32 %v397, %v419
    %s422 = scalar_lea.vmem %s1, 136
    %v423 = vld [vmem:[%s422] sm:$0xff]
    %s424 = scalar_lea.vmem %s0, 33
    %v425 = vld [vmem:[%s424] ss:$8 sm:$0x3]
    %427 = vset.pattern.permute.xlu0 0
    %428 = vperm.xlu0 %427, %v423
    %v429 = vpop.permute.xlu0 %428
    %v432 = vlaneseq
    %v433 = vshrl.u32 %v432, 7
    %v434 = vsub.s32 0, %v433
    %v435 = vrot.slane %v425, %v434
    %v436 = vlaneseq
    %v437 = vshrl.u32 %v436, 7
    %v438 = vsub.s32 1, %v437
    %v439 = vrot.slane %v425, %v438
    %v442 = vmul.f32 %v429, %v435
    %v443 = vmul.f32 %v429, %v439
    %v444 = vadd.f32 %v420, %v442
    %v445 = vadd.f32 %v421, %v443
    %s446 = scalar_lea.vmem %s1, 144
    %v447 = vld [vmem:[%s446] sm:$0xff]
    %s448 = scalar_lea.vmem %s0, 34
    %v449 = vld [vmem:[%s448] ss:$8 sm:$0x3]
    %451 = vset.pattern.permute.xlu0 0
    %452 = vperm.xlu0 %451, %v447
    %v453 = vpop.permute.xlu0 %452
    %v456 = vlaneseq
    %v457 = vshrl.u32 %v456, 7
    %v458 = vsub.s32 0, %v457
    %v459 = vrot.slane %v449, %v458
    %v460 = vlaneseq
    %v461 = vshrl.u32 %v460, 7
    %v462 = vsub.s32 1, %v461
    %v463 = vrot.slane %v449, %v462
    %v466 = vmul.f32 %v453, %v459
    %v467 = vmul.f32 %v453, %v463
    %v468 = vadd.f32 %v444, %v466
    %v469 = vadd.f32 %v445, %v467
    %s470 = scalar_lea.vmem %s1, 152
    %v471 = vld [vmem:[%s470] sm:$0xff]
    %s472 = scalar_lea.vmem %s0, 35
    %v473 = vld [vmem:[%s472] ss:$8 sm:$0x3]
    %475 = vset.pattern.permute.xlu0 0
    %476 = vperm.xlu0 %475, %v471
    %v477 = vpop.permute.xlu0 %476
    %v480 = vlaneseq
    %v481 = vshrl.u32 %v480, 7
    %v482 = vsub.s32 0, %v481
    %v483 = vrot.slane %v473, %v482
    %v484 = vlaneseq
    %v485 = vshrl.u32 %v484, 7
    %v486 = vsub.s32 1, %v485
    %v487 = vrot.slane %v473, %v486
    %v490 = vmul.f32 %v477, %v483
    %v491 = vmul.f32 %v477, %v487
    %v492 = vadd.f32 %v468, %v490
    %v493 = vadd.f32 %v469, %v491
    %s494 = scalar_lea.vmem %s1, 160
    %v495 = vld [vmem:[%s494] sm:$0xff]
    %s496 = scalar_lea.vmem %s0, 36
    %v497 = vld [vmem:[%s496] ss:$8 sm:$0x3]
    %499 = vset.pattern.permute.xlu0 0
    %500 = vperm.xlu0 %499, %v495
    %v501 = vpop.permute.xlu0 %500
    %v504 = vlaneseq
    %v505 = vshrl.u32 %v504, 7
    %v506 = vsub.s32 0, %v505
    %v507 = vrot.slane %v497, %v506
    %v508 = vlaneseq
    %v509 = vshrl.u32 %v508, 7
    %v510 = vsub.s32 1, %v509
    %v511 = vrot.slane %v497, %v510
    %v514 = vmul.f32 %v501, %v507
    %v515 = vmul.f32 %v501, %v511
    %v516 = vadd.f32 %v492, %v514
    %v517 = vadd.f32 %v493, %v515
    %s518 = scalar_lea.vmem %s1, 168
    %v519 = vld [vmem:[%s518] sm:$0xff]
    %s520 = scalar_lea.vmem %s0, 37
    %v521 = vld [vmem:[%s520] ss:$8 sm:$0x3]
    %523 = vset.pattern.permute.xlu0 0
    %524 = vperm.xlu0 %523, %v519
    %v525 = vpop.permute.xlu0 %524
    %v528 = vlaneseq
    %v529 = vshrl.u32 %v528, 7
    %v530 = vsub.s32 0, %v529
    %v531 = vrot.slane %v521, %v530
    %v532 = vlaneseq
    %v533 = vshrl.u32 %v532, 7
    %v534 = vsub.s32 1, %v533
    %v535 = vrot.slane %v521, %v534
    %v538 = vmul.f32 %v525, %v531
    %v539 = vmul.f32 %v525, %v535
    %v540 = vadd.f32 %v516, %v538
    %v541 = vadd.f32 %v517, %v539
    %s542 = scalar_lea.vmem %s1, 176
    %v543 = vld [vmem:[%s542] sm:$0xff]
    %s544 = scalar_lea.vmem %s0, 38
    %v545 = vld [vmem:[%s544] ss:$8 sm:$0x3]
    %547 = vset.pattern.permute.xlu0 0
    %548 = vperm.xlu0 %547, %v543
    %v549 = vpop.permute.xlu0 %548
    %v552 = vlaneseq
    %v553 = vshrl.u32 %v552, 7
    %v554 = vsub.s32 0, %v553
    %v555 = vrot.slane %v545, %v554
    %v556 = vlaneseq
    %v557 = vshrl.u32 %v556, 7
    %v558 = vsub.s32 1, %v557
    %v559 = vrot.slane %v545, %v558
    %v562 = vmul.f32 %v549, %v555
    %v563 = vmul.f32 %v549, %v559
    %v564 = vadd.f32 %v540, %v562
    %v565 = vadd.f32 %v541, %v563
    %s566 = scalar_lea.vmem %s1, 184
    %v567 = vld [vmem:[%s566] sm:$0xff]
    %s568 = scalar_lea.vmem %s0, 39
    %v569 = vld [vmem:[%s568] ss:$8 sm:$0x3]
    %571 = vset.pattern.permute.xlu0 0
    %572 = vperm.xlu0 %571, %v567
    %v573 = vpop.permute.xlu0 %572
    %v576 = vlaneseq
    %v577 = vshrl.u32 %v576, 7
    %v578 = vsub.s32 0, %v577
    %v579 = vrot.slane %v569, %v578
    %v580 = vlaneseq
    %v581 = vshrl.u32 %v580, 7
    %v582 = vsub.s32 1, %v581
    %v583 = vrot.slane %v569, %v582
    %v586 = vmul.f32 %v573, %v579
    %v587 = vmul.f32 %v573, %v583
    %v588 = vadd.f32 %v564, %v586
    %v589 = vadd.f32 %v565, %v587
    %s590 = scalar_lea.vmem %s1, 192
    %v591 = vld [vmem:[%s590] sm:$0xff]
    %s592 = scalar_lea.vmem %s0, 48
    %v593 = vld [vmem:[%s592] ss:$8 sm:$0x3]
    %595 = vset.pattern.permute.xlu0 0
    %596 = vperm.xlu0 %595, %v591
    %v597 = vpop.permute.xlu0 %596
    %v600 = vlaneseq
    %v601 = vshrl.u32 %v600, 7
    %v602 = vsub.s32 0, %v601
    %v603 = vrot.slane %v593, %v602
    %v604 = vlaneseq
    %v605 = vshrl.u32 %v604, 7
    %v606 = vsub.s32 1, %v605
    %v607 = vrot.slane %v593, %v606
    %v610 = vmul.f32 %v597, %v603
    %v611 = vmul.f32 %v597, %v607
    %v612 = vadd.f32 %v588, %v610
    %v613 = vadd.f32 %v589, %v611
    %s614 = scalar_lea.vmem %s1, 200
    %v615 = vld [vmem:[%s614] sm:$0xff]
    %s616 = scalar_lea.vmem %s0, 49
    %v617 = vld [vmem:[%s616] ss:$8 sm:$0x3]
    %619 = vset.pattern.permute.xlu0 0
    %620 = vperm.xlu0 %619, %v615
    %v621 = vpop.permute.xlu0 %620
    %v624 = vlaneseq
    %v625 = vshrl.u32 %v624, 7
    %v626 = vsub.s32 0, %v625
    %v627 = vrot.slane %v617, %v626
    %v628 = vlaneseq
    %v629 = vshrl.u32 %v628, 7
    %v630 = vsub.s32 1, %v629
    %v631 = vrot.slane %v617, %v630
    %v634 = vmul.f32 %v621, %v627
    %v635 = vmul.f32 %v621, %v631
    %v636 = vadd.f32 %v612, %v634
    %v637 = vadd.f32 %v613, %v635
    %s638 = scalar_lea.vmem %s1, 208
    %v639 = vld [vmem:[%s638] sm:$0xff]
    %s640 = scalar_lea.vmem %s0, 50
    %v641 = vld [vmem:[%s640] ss:$8 sm:$0x3]
    %643 = vset.pattern.permute.xlu0 0
    %644 = vperm.xlu0 %643, %v639
    %v645 = vpop.permute.xlu0 %644
    %v648 = vlaneseq
    %v649 = vshrl.u32 %v648, 7
    %v650 = vsub.s32 0, %v649
    %v651 = vrot.slane %v641, %v650
    %v652 = vlaneseq
    %v653 = vshrl.u32 %v652, 7
    %v654 = vsub.s32 1, %v653
    %v655 = vrot.slane %v641, %v654
    %v658 = vmul.f32 %v645, %v651
    %v659 = vmul.f32 %v645, %v655
    %v660 = vadd.f32 %v636, %v658
    %v661 = vadd.f32 %v637, %v659
    %s662 = scalar_lea.vmem %s1, 216
    %v663 = vld [vmem:[%s662] sm:$0xff]
    %s664 = scalar_lea.vmem %s0, 51
    %v665 = vld [vmem:[%s664] ss:$8 sm:$0x3]
    %667 = vset.pattern.permute.xlu0 0
    %668 = vperm.xlu0 %667, %v663
    %v669 = vpop.permute.xlu0 %668
    %v672 = vlaneseq
    %v673 = vshrl.u32 %v672, 7
    %v674 = vsub.s32 0, %v673
    %v675 = vrot.slane %v665, %v674
    %v676 = vlaneseq
    %v677 = vshrl.u32 %v676, 7
    %v678 = vsub.s32 1, %v677
    %v679 = vrot.slane %v665, %v678
    %v682 = vmul.f32 %v669, %v675
    %v683 = vmul.f32 %v669, %v679
    %v684 = vadd.f32 %v660, %v682
    %v685 = vadd.f32 %v661, %v683
    %s686 = scalar_lea.vmem %s1, 224
    %v687 = vld [vmem:[%s686] sm:$0xff]
    %s688 = scalar_lea.vmem %s0, 52
    %v689 = vld [vmem:[%s688] ss:$8 sm:$0x3]
    %691 = vset.pattern.permute.xlu0 0
    %692 = vperm.xlu0 %691, %v687
    %v693 = vpop.permute.xlu0 %692
    %v696 = vlaneseq
    %v697 = vshrl.u32 %v696, 7
    %v698 = vsub.s32 0, %v697
    %v699 = vrot.slane %v689, %v698
    %v700 = vlaneseq
    %v701 = vshrl.u32 %v700, 7
    %v702 = vsub.s32 1, %v701
    %v703 = vrot.slane %v689, %v702
    %v706 = vmul.f32 %v693, %v699
    %v707 = vmul.f32 %v693, %v703
    %v708 = vadd.f32 %v684, %v706
    %v709 = vadd.f32 %v685, %v707
    %s710 = scalar_lea.vmem %s1, 232
    %v711 = vld [vmem:[%s710] sm:$0xff]
    %s712 = scalar_lea.vmem %s0, 53
    %v713 = vld [vmem:[%s712] ss:$8 sm:$0x3]
    %715 = vset.pattern.permute.xlu0 0
    %716 = vperm.xlu0 %715, %v711
    %v717 = vpop.permute.xlu0 %716
    %v720 = vlaneseq
    %v721 = vshrl.u32 %v720, 7
    %v722 = vsub.s32 0, %v721
    %v723 = vrot.slane %v713, %v722
    %v724 = vlaneseq
    %v725 = vshrl.u32 %v724, 7
    %v726 = vsub.s32 1, %v725
    %v727 = vrot.slane %v713, %v726
    %v730 = vmul.f32 %v717, %v723
    %v731 = vmul.f32 %v717, %v727
    %v732 = vadd.f32 %v708, %v730
    %v733 = vadd.f32 %v709, %v731
    %s734 = scalar_lea.vmem %s1, 240
    %v735 = vld [vmem:[%s734] sm:$0xff]
    %s736 = scalar_lea.vmem %s0, 54
    %v737 = vld [vmem:[%s736] ss:$8 sm:$0x3]
    %739 = vset.pattern.permute.xlu0 0
    %740 = vperm.xlu0 %739, %v735
    %v741 = vpop.permute.xlu0 %740
    %v744 = vlaneseq
    %v745 = vshrl.u32 %v744, 7
    %v746 = vsub.s32 0, %v745
    %v747 = vrot.slane %v737, %v746
    %v748 = vlaneseq
    %v749 = vshrl.u32 %v748, 7
    %v750 = vsub.s32 1, %v749
    %v751 = vrot.slane %v737, %v750
    %v754 = vmul.f32 %v741, %v747
    %v755 = vmul.f32 %v741, %v751
    %v756 = vadd.f32 %v732, %v754
    %v757 = vadd.f32 %v733, %v755
    %s758 = scalar_lea.vmem %s1, 248
    %v759 = vld [vmem:[%s758] sm:$0xff]
    %s760 = scalar_lea.vmem %s0, 55
    %v761 = vld [vmem:[%s760] ss:$8 sm:$0x3]
    %763 = vset.pattern.permute.xlu0 0
    %764 = vperm.xlu0 %763, %v759
    %v765 = vpop.permute.xlu0 %764
    %v768 = vlaneseq
    %v769 = vshrl.u32 %v768, 7
    %v770 = vsub.s32 0, %v769
    %v771 = vrot.slane %v761, %v770
    %v772 = vlaneseq
    %v773 = vshrl.u32 %v772, 7
    %v774 = vsub.s32 1, %v773
    %v775 = vrot.slane %v761, %v774
    %v778 = vmul.f32 %v765, %v771
    %v779 = vmul.f32 %v765, %v775
    %v780 = vadd.f32 %v756, %v778
    %v781 = vadd.f32 %v757, %v779
    %s782 = scalar_lea.vmem %s1, 256
    %v783 = vld [vmem:[%s782] sm:$0xff]
    %s784 = scalar_lea.vmem %s0, 64
    %v785 = vld [vmem:[%s784] ss:$8 sm:$0x3]
    %787 = vset.pattern.permute.xlu0 0
    %788 = vperm.xlu0 %787, %v783
    %v789 = vpop.permute.xlu0 %788
    %v792 = vlaneseq
    %v793 = vshrl.u32 %v792, 7
    %v794 = vsub.s32 0, %v793
    %v795 = vrot.slane %v785, %v794
    %v796 = vlaneseq
    %v797 = vshrl.u32 %v796, 7
    %v798 = vsub.s32 1, %v797
    %v799 = vrot.slane %v785, %v798
    %v802 = vmul.f32 %v789, %v795
    %v803 = vmul.f32 %v789, %v799
    %v804 = vadd.f32 %v780, %v802
    %v805 = vadd.f32 %v781, %v803
    %s806 = scalar_lea.vmem %s1, 264
    %v807 = vld [vmem:[%s806] sm:$0xff]
    %s808 = scalar_lea.vmem %s0, 65
    %v809 = vld [vmem:[%s808] ss:$8 sm:$0x3]
    %811 = vset.pattern.permute.xlu0 0
    %812 = vperm.xlu0 %811, %v807
    %v813 = vpop.permute.xlu0 %812
    %v816 = vlaneseq
    %v817 = vshrl.u32 %v816, 7
    %v818 = vsub.s32 0, %v817
    %v819 = vrot.slane %v809, %v818
    %v820 = vlaneseq
    %v821 = vshrl.u32 %v820, 7
    %v822 = vsub.s32 1, %v821
    %v823 = vrot.slane %v809, %v822
    %v826 = vmul.f32 %v813, %v819
    %v827 = vmul.f32 %v813, %v823
    %v828 = vadd.f32 %v804, %v826
    %v829 = vadd.f32 %v805, %v827
    %s830 = scalar_lea.vmem %s1, 272
    %v831 = vld [vmem:[%s830] sm:$0xff]
    %s832 = scalar_lea.vmem %s0, 66
    %v833 = vld [vmem:[%s832] ss:$8 sm:$0x3]
    %835 = vset.pattern.permute.xlu0 0
    %836 = vperm.xlu0 %835, %v831
    %v837 = vpop.permute.xlu0 %836
    %v840 = vlaneseq
    %v841 = vshrl.u32 %v840, 7
    %v842 = vsub.s32 0, %v841
    %v843 = vrot.slane %v833, %v842
    %v844 = vlaneseq
    %v845 = vshrl.u32 %v844, 7
    %v846 = vsub.s32 1, %v845
    %v847 = vrot.slane %v833, %v846
    %v850 = vmul.f32 %v837, %v843
    %v851 = vmul.f32 %v837, %v847
    %v852 = vadd.f32 %v828, %v850
    %v853 = vadd.f32 %v829, %v851
    %s854 = scalar_lea.vmem %s1, 280
    %v855 = vld [vmem:[%s854] sm:$0xff]
    %s856 = scalar_lea.vmem %s0, 67
    %v857 = vld [vmem:[%s856] ss:$8 sm:$0x3]
    %859 = vset.pattern.permute.xlu0 0
    %860 = vperm.xlu0 %859, %v855
    %v861 = vpop.permute.xlu0 %860
    %v864 = vlaneseq
    %v865 = vshrl.u32 %v864, 7
    %v866 = vsub.s32 0, %v865
    %v867 = vrot.slane %v857, %v866
    %v868 = vlaneseq
    %v869 = vshrl.u32 %v868, 7
    %v870 = vsub.s32 1, %v869
    %v871 = vrot.slane %v857, %v870
    %v874 = vmul.f32 %v861, %v867
    %v875 = vmul.f32 %v861, %v871
    %v876 = vadd.f32 %v852, %v874
    %v877 = vadd.f32 %v853, %v875
    %879 = vset.pattern.permute.xlu0 0
    %880 = vperm.xlu0 %879, %v15
    %v881 = vpop.permute.xlu0 %880
    %v883 = vadd.f32 %v876, %v881
    %v884 = vadd.f32 %v877, %v881
    %885 = vst [vmem:[#allocation2] sm:$0xff] %v883
    %886 = vst [vmem:[#allocation2 + $0x8] sm:$0xff] %v884
    %v887 = vld [vmem:[%s1] sm:$0xff]
    %s888 = scalar_lea.vmem %s0, 80
    %v889 = vld [vmem:[%s888] ss:$8 sm:$0x3]
    %891 = vset.pattern.permute.xlu0 0
    %892 = vperm.xlu0 %891, %v887
    %v893 = vpop.permute.xlu0 %892
    %v896 = vlaneseq
    %v897 = vshrl.u32 %v896, 7
    %v898 = vsub.s32 0, %v897
    %v899 = vrot.slane %v889, %v898
    %v900 = vlaneseq
    %v901 = vshrl.u32 %v900, 7
    %v902 = vsub.s32 1, %v901
    %v903 = vrot.slane %v889, %v902
    %v906 = vmul.f32 %v893, %v899
    %v907 = vmul.f32 %v893, %v903
    %v908 = vadd.f32 %v906, 0.0
    %v909 = vadd.f32 %v907, 0.0
    %v910 = vld [vmem:[%s38] sm:$0xff]
    %s911 = scalar_lea.vmem %s888, 1
    %v912 = vld [vmem:[%s911] ss:$8 sm:$0x3]
    %914 = vset.pattern.permute.xlu0 0
    %915 = vperm.xlu0 %914, %v910
    %v916 = vpop.permute.xlu0 %915
    %v919 = vlaneseq
    %v920 = vshrl.u32 %v919, 7
    %v921 = vsub.s32 0, %v920
    %v922 = vrot.slane %v912, %v921
    %v923 = vlaneseq
    %v924 = vshrl.u32 %v923, 7
    %v925 = vsub.s32 1, %v924
    %v926 = vrot.slane %v912, %v925
    %v929 = vmul.f32 %v916, %v922
    %v930 = vmul.f32 %v916, %v926
    %v931 = vadd.f32 %v908, %v929
    %v932 = vadd.f32 %v909, %v930
    %v933 = vld [vmem:[%s62] sm:$0xff]
    %s934 = scalar_lea.vmem %s888, 2
    %v935 = vld [vmem:[%s934] ss:$8 sm:$0x3]
    %937 = vset.pattern.permute.xlu0 0
    %938 = vperm.xlu0 %937, %v933
    %v939 = vpop.permute.xlu0 %938
    %v942 = vlaneseq
    %v943 = vshrl.u32 %v942, 7
    %v944 = vsub.s32 0, %v943
    %v945 = vrot.slane %v935, %v944
    %v946 = vlaneseq
    %v947 = vshrl.u32 %v946, 7
    %v948 = vsub.s32 1, %v947
    %v949 = vrot.slane %v935, %v948
    %v952 = vmul.f32 %v939, %v945
    %v953 = vmul.f32 %v939, %v949
    %v954 = vadd.f32 %v931, %v952
    %v955 = vadd.f32 %v932, %v953
    %v956 = vld [vmem:[%s86] sm:$0xff]
    %s957 = scalar_lea.vmem %s888, 3
    %v958 = vld [vmem:[%s957] ss:$8 sm:$0x3]
    %960 = vset.pattern.permute.xlu0 0
    %961 = vperm.xlu0 %960, %v956
    %v962 = vpop.permute.xlu0 %961
    %v965 = vlaneseq
    %v966 = vshrl.u32 %v965, 7
    %v967 = vsub.s32 0, %v966
    %v968 = vrot.slane %v958, %v967
    %v969 = vlaneseq
    %v970 = vshrl.u32 %v969, 7
    %v971 = vsub.s32 1, %v970
    %v972 = vrot.slane %v958, %v971
    %v975 = vmul.f32 %v962, %v968
    %v976 = vmul.f32 %v962, %v972
    %v977 = vadd.f32 %v954, %v975
    %v978 = vadd.f32 %v955, %v976
    %v979 = vld [vmem:[%s110] sm:$0xff]
    %s980 = scalar_lea.vmem %s888, 4
    %v981 = vld [vmem:[%s980] ss:$8 sm:$0x3]
    %983 = vset.pattern.permute.xlu0 0
    %984 = vperm.xlu0 %983, %v979
    %v985 = vpop.permute.xlu0 %984
    %v988 = vlaneseq
    %v989 = vshrl.u32 %v988, 7
    %v990 = vsub.s32 0, %v989
    %v991 = vrot.slane %v981, %v990
    %v992 = vlaneseq
    %v993 = vshrl.u32 %v992, 7
    %v994 = vsub.s32 1, %v993
    %v995 = vrot.slane %v981, %v994
    %v998 = vmul.f32 %v985, %v991
    %v999 = vmul.f32 %v985, %v995
    %v1000 = vadd.f32 %v977, %v998
    %v1001 = vadd.f32 %v978, %v999
    %v1002 = vld [vmem:[%s134] sm:$0xff]
    %s1003 = scalar_lea.vmem %s888, 5
    %v1004 = vld [vmem:[%s1003] ss:$8 sm:$0x3]
    %1006 = vset.pattern.permute.xlu0 0
    %1007 = vperm.xlu0 %1006, %v1002
    %v1008 = vpop.permute.xlu0 %1007
    %v1011 = vlaneseq
    %v1012 = vshrl.u32 %v1011, 7
    %v1013 = vsub.s32 0, %v1012
    %v1014 = vrot.slane %v1004, %v1013
    %v1015 = vlaneseq
    %v1016 = vshrl.u32 %v1015, 7
    %v1017 = vsub.s32 1, %v1016
    %v1018 = vrot.slane %v1004, %v1017
    %v1021 = vmul.f32 %v1008, %v1014
    %v1022 = vmul.f32 %v1008, %v1018
    %v1023 = vadd.f32 %v1000, %v1021
    %v1024 = vadd.f32 %v1001, %v1022
    %v1025 = vld [vmem:[%s158] sm:$0xff]
    %s1026 = scalar_lea.vmem %s888, 6
    %v1027 = vld [vmem:[%s1026] ss:$8 sm:$0x3]
    %1029 = vset.pattern.permute.xlu0 0
    %1030 = vperm.xlu0 %1029, %v1025
    %v1031 = vpop.permute.xlu0 %1030
    %v1034 = vlaneseq
    %v1035 = vshrl.u32 %v1034, 7
    %v1036 = vsub.s32 0, %v1035
    %v1037 = vrot.slane %v1027, %v1036
    %v1038 = vlaneseq
    %v1039 = vshrl.u32 %v1038, 7
    %v1040 = vsub.s32 1, %v1039
    %v1041 = vrot.slane %v1027, %v1040
    %v1044 = vmul.f32 %v1031, %v1037
    %v1045 = vmul.f32 %v1031, %v1041
    %v1046 = vadd.f32 %v1023, %v1044
    %v1047 = vadd.f32 %v1024, %v1045
    %v1048 = vld [vmem:[%s182] sm:$0xff]
    %s1049 = scalar_lea.vmem %s888, 7
    %v1050 = vld [vmem:[%s1049] ss:$8 sm:$0x3]
    %1052 = vset.pattern.permute.xlu0 0
    %1053 = vperm.xlu0 %1052, %v1048
    %v1054 = vpop.permute.xlu0 %1053
    %v1057 = vlaneseq
    %v1058 = vshrl.u32 %v1057, 7
    %v1059 = vsub.s32 0, %v1058
    %v1060 = vrot.slane %v1050, %v1059
    %v1061 = vlaneseq
    %v1062 = vshrl.u32 %v1061, 7
    %v1063 = vsub.s32 1, %v1062
    %v1064 = vrot.slane %v1050, %v1063
    %v1067 = vmul.f32 %v1054, %v1060
    %v1068 = vmul.f32 %v1054, %v1064
    %v1069 = vadd.f32 %v1046, %v1067
    %v1070 = vadd.f32 %v1047, %v1068
    %v1071 = vld [vmem:[%s206] sm:$0xff]
    %s1072 = scalar_lea.vmem %s888, 16
    %v1073 = vld [vmem:[%s1072] ss:$8 sm:$0x3]
    %1075 = vset.pattern.permute.xlu0 0
    %1076 = vperm.xlu0 %1075, %v1071
    %v1077 = vpop.permute.xlu0 %1076
    %v1080 = vlaneseq
    %v1081 = vshrl.u32 %v1080, 7
    %v1082 = vsub.s32 0, %v1081
    %v1083 = vrot.slane %v1073, %v1082
    %v1084 = vlaneseq
    %v1085 = vshrl.u32 %v1084, 7
    %v1086 = vsub.s32 1, %v1085
    %v1087 = vrot.slane %v1073, %v1086
    %v1090 = vmul.f32 %v1077, %v1083
    %v1091 = vmul.f32 %v1077, %v1087
    %v1092 = vadd.f32 %v1069, %v1090
    %v1093 = vadd.f32 %v1070, %v1091
    %v1094 = vld [vmem:[%s230] sm:$0xff]
    %s1095 = scalar_lea.vmem %s888, 17
    %v1096 = vld [vmem:[%s1095] ss:$8 sm:$0x3]
    %1098 = vset.pattern.permute.xlu0 0
    %1099 = vperm.xlu0 %1098, %v1094
    %v1100 = vpop.permute.xlu0 %1099
    %v1103 = vlaneseq
    %v1104 = vshrl.u32 %v1103, 7
    %v1105 = vsub.s32 0, %v1104
    %v1106 = vrot.slane %v1096, %v1105
    %v1107 = vlaneseq
    %v1108 = vshrl.u32 %v1107, 7
    %v1109 = vsub.s32 1, %v1108
    %v1110 = vrot.slane %v1096, %v1109
    %v1113 = vmul.f32 %v1100, %v1106
    %v1114 = vmul.f32 %v1100, %v1110
    %v1115 = vadd.f32 %v1092, %v1113
    %v1116 = vadd.f32 %v1093, %v1114
    %v1117 = vld [vmem:[%s254] sm:$0xff]
    %s1118 = scalar_lea.vmem %s888, 18
    %v1119 = vld [vmem:[%s1118] ss:$8 sm:$0x3]
    %1121 = vset.pattern.permute.xlu0 0
    %1122 = vperm.xlu0 %1121, %v1117
    %v1123 = vpop.permute.xlu0 %1122
    %v1126 = vlaneseq
    %v1127 = vshrl.u32 %v1126, 7
    %v1128 = vsub.s32 0, %v1127
    %v1129 = vrot.slane %v1119, %v1128
    %v1130 = vlaneseq
    %v1131 = vshrl.u32 %v1130, 7
    %v1132 = vsub.s32 1, %v1131
    %v1133 = vrot.slane %v1119, %v1132
    %v1136 = vmul.f32 %v1123, %v1129
    %v1137 = vmul.f32 %v1123, %v1133
    %v1138 = vadd.f32 %v1115, %v1136
    %v1139 = vadd.f32 %v1116, %v1137
    %v1140 = vld [vmem:[%s278] sm:$0xff]
    %s1141 = scalar_lea.vmem %s888, 19
    %v1142 = vld [vmem:[%s1141] ss:$8 sm:$0x3]
    %1144 = vset.pattern.permute.xlu0 0
    %1145 = vperm.xlu0 %1144, %v1140
    %v1146 = vpop.permute.xlu0 %1145
    %v1149 = vlaneseq
    %v1150 = vshrl.u32 %v1149, 7
    %v1151 = vsub.s32 0, %v1150
    %v1152 = vrot.slane %v1142, %v1151
    %v1153 = vlaneseq
    %v1154 = vshrl.u32 %v1153, 7
    %v1155 = vsub.s32 1, %v1154
    %v1156 = vrot.slane %v1142, %v1155
    %v1159 = vmul.f32 %v1146, %v1152
    %v1160 = vmul.f32 %v1146, %v1156
    %v1161 = vadd.f32 %v1138, %v1159
    %v1162 = vadd.f32 %v1139, %v1160
    %v1163 = vld [vmem:[%s302] sm:$0xff]
    %s1164 = scalar_lea.vmem %s888, 20
    %v1165 = vld [vmem:[%s1164] ss:$8 sm:$0x3]
    %1167 = vset.pattern.permute.xlu0 0
    %1168 = vperm.xlu0 %1167, %v1163
    %v1169 = vpop.permute.xlu0 %1168
    %v1172 = vlaneseq
    %v1173 = vshrl.u32 %v1172, 7
    %v1174 = vsub.s32 0, %v1173
    %v1175 = vrot.slane %v1165, %v1174
    %v1176 = vlaneseq
    %v1177 = vshrl.u32 %v1176, 7
    %v1178 = vsub.s32 1, %v1177
    %v1179 = vrot.slane %v1165, %v1178
    %v1182 = vmul.f32 %v1169, %v1175
    %v1183 = vmul.f32 %v1169, %v1179
    %v1184 = vadd.f32 %v1161, %v1182
    %v1185 = vadd.f32 %v1162, %v1183
    %v1186 = vld [vmem:[%s326] sm:$0xff]
    %s1187 = scalar_lea.vmem %s888, 21
    %v1188 = vld [vmem:[%s1187] ss:$8 sm:$0x3]
    %1190 = vset.pattern.permute.xlu0 0
    %1191 = vperm.xlu0 %1190, %v1186
    %v1192 = vpop.permute.xlu0 %1191
    %v1195 = vlaneseq
    %v1196 = vshrl.u32 %v1195, 7
    %v1197 = vsub.s32 0, %v1196
    %v1198 = vrot.slane %v1188, %v1197
    %v1199 = vlaneseq
    %v1200 = vshrl.u32 %v1199, 7
    %v1201 = vsub.s32 1, %v1200
    %v1202 = vrot.slane %v1188, %v1201
    %v1205 = vmul.f32 %v1192, %v1198
    %v1206 = vmul.f32 %v1192, %v1202
    %v1207 = vadd.f32 %v1184, %v1205
    %v1208 = vadd.f32 %v1185, %v1206
    %v1209 = vld [vmem:[%s350] sm:$0xff]
    %s1210 = scalar_lea.vmem %s888, 22
    %v1211 = vld [vmem:[%s1210] ss:$8 sm:$0x3]
    %1213 = vset.pattern.permute.xlu0 0
    %1214 = vperm.xlu0 %1213, %v1209
    %v1215 = vpop.permute.xlu0 %1214
    %v1218 = vlaneseq
    %v1219 = vshrl.u32 %v1218, 7
    %v1220 = vsub.s32 0, %v1219
    %v1221 = vrot.slane %v1211, %v1220
    %v1222 = vlaneseq
    %v1223 = vshrl.u32 %v1222, 7
    %v1224 = vsub.s32 1, %v1223
    %v1225 = vrot.slane %v1211, %v1224
    %v1228 = vmul.f32 %v1215, %v1221
    %v1229 = vmul.f32 %v1215, %v1225
    %v1230 = vadd.f32 %v1207, %v1228
    %v1231 = vadd.f32 %v1208, %v1229
    %v1232 = vld [vmem:[%s374] sm:$0xff]
    %s1233 = scalar_lea.vmem %s888, 23
    %v1234 = vld [vmem:[%s1233] ss:$8 sm:$0x3]
    %1236 = vset.pattern.permute.xlu0 0
    %1237 = vperm.xlu0 %1236, %v1232
    %v1238 = vpop.permute.xlu0 %1237
    %v1241 = vlaneseq
    %v1242 = vshrl.u32 %v1241, 7
    %v1243 = vsub.s32 0, %v1242
    %v1244 = vrot.slane %v1234, %v1243
    %v1245 = vlaneseq
    %v1246 = vshrl.u32 %v1245, 7
    %v1247 = vsub.s32 1, %v1246
    %v1248 = vrot.slane %v1234, %v1247
    %v1251 = vmul.f32 %v1238, %v1244
    %v1252 = vmul.f32 %v1238, %v1248
    %v1253 = vadd.f32 %v1230, %v1251
    %v1254 = vadd.f32 %v1231, %v1252
    %v1255 = vld [vmem:[%s398] sm:$0xff]
    %s1256 = scalar_lea.vmem %s888, 32
    %v1257 = vld [vmem:[%s1256] ss:$8 sm:$0x3]
    %1259 = vset.pattern.permute.xlu0 0
    %1260 = vperm.xlu0 %1259, %v1255
    %v1261 = vpop.permute.xlu0 %1260
    %v1264 = vlaneseq
    %v1265 = vshrl.u32 %v1264, 7
    %v1266 = vsub.s32 0, %v1265
    %v1267 = vrot.slane %v1257, %v1266
    %v1268 = vlaneseq
    %v1269 = vshrl.u32 %v1268, 7
    %v1270 = vsub.s32 1, %v1269
    %v1271 = vrot.slane %v1257, %v1270
    %v1274 = vmul.f32 %v1261, %v1267
    %v1275 = vmul.f32 %v1261, %v1271
    %v1276 = vadd.f32 %v1253, %v1274
    %v1277 = vadd.f32 %v1254, %v1275
    %v1278 = vld [vmem:[%s422] sm:$0xff]
    %s1279 = scalar_lea.vmem %s888, 33
    %v1280 = vld [vmem:[%s1279] ss:$8 sm:$0x3]
    %1282 = vset.pattern.permute.xlu0 0
    %1283 = vperm.xlu0 %1282, %v1278
    %v1284 = vpop.permute.xlu0 %1283
    %v1287 = vlaneseq
    %v1288 = vshrl.u32 %v1287, 7
    %v1289 = vsub.s32 0, %v1288
    %v1290 = vrot.slane %v1280, %v1289
    %v1291 = vlaneseq
    %v1292 = vshrl.u32 %v1291, 7
    %v1293 = vsub.s32 1, %v1292
    %v1294 = vrot.slane %v1280, %v1293
    %v1297 = vmul.f32 %v1284, %v1290
    %v1298 = vmul.f32 %v1284, %v1294
    %v1299 = vadd.f32 %v1276, %v1297
    %v1300 = vadd.f32 %v1277, %v1298
    %v1301 = vld [vmem:[%s446] sm:$0xff]
    %s1302 = scalar_lea.vmem %s888, 34
    %v1303 = vld [vmem:[%s1302] ss:$8 sm:$0x3]
    %1305 = vset.pattern.permute.xlu0 0
    %1306 = vperm.xlu0 %1305, %v1301
    %v1307 = vpop.permute.xlu0 %1306
    %v1310 = vlaneseq
    %v1311 = vshrl.u32 %v1310, 7
    %v1312 = vsub.s32 0, %v1311
    %v1313 = vrot.slane %v1303, %v1312
    %v1314 = vlaneseq
    %v1315 = vshrl.u32 %v1314, 7
    %v1316 = vsub.s32 1, %v1315
    %v1317 = vrot.slane %v1303, %v1316
    %v1320 = vmul.f32 %v1307, %v1313
    %v1321 = vmul.f32 %v1307, %v1317
    %v1322 = vadd.f32 %v1299, %v1320
    %v1323 = vadd.f32 %v1300, %v1321
    %v1324 = vld [vmem:[%s470] sm:$0xff]
    %s1325 = scalar_lea.vmem %s888, 35
    %v1326 = vld [vmem:[%s1325] ss:$8 sm:$0x3]
    %1328 = vset.pattern.permute.xlu0 0
    %1329 = vperm.xlu0 %1328, %v1324
    %v1330 = vpop.permute.xlu0 %1329
    %v1333 = vlaneseq
    %v1334 = vshrl.u32 %v1333, 7
    %v1335 = vsub.s32 0, %v1334
    %v1336 = vrot.slane %v1326, %v1335
    %v1337 = vlaneseq
    %v1338 = vshrl.u32 %v1337, 7
    %v1339 = vsub.s32 1, %v1338
    %v1340 = vrot.slane %v1326, %v1339
    %v1343 = vmul.f32 %v1330, %v1336
    %v1344 = vmul.f32 %v1330, %v1340
    %v1345 = vadd.f32 %v1322, %v1343
    %v1346 = vadd.f32 %v1323, %v1344
    %v1347 = vld [vmem:[%s494] sm:$0xff]
    %s1348 = scalar_lea.vmem %s888, 36
    %v1349 = vld [vmem:[%s1348] ss:$8 sm:$0x3]
    %1351 = vset.pattern.permute.xlu0 0
    %1352 = vperm.xlu0 %1351, %v1347
    %v1353 = vpop.permute.xlu0 %1352
    %v1356 = vlaneseq
    %v1357 = vshrl.u32 %v1356, 7
    %v1358 = vsub.s32 0, %v1357
    %v1359 = vrot.slane %v1349, %v1358
    %v1360 = vlaneseq
    %v1361 = vshrl.u32 %v1360, 7
    %v1362 = vsub.s32 1, %v1361
    %v1363 = vrot.slane %v1349, %v1362
    %v1366 = vmul.f32 %v1353, %v1359
    %v1367 = vmul.f32 %v1353, %v1363
    %v1368 = vadd.f32 %v1345, %v1366
    %v1369 = vadd.f32 %v1346, %v1367
    %v1370 = vld [vmem:[%s518] sm:$0xff]
    %s1371 = scalar_lea.vmem %s888, 37
    %v1372 = vld [vmem:[%s1371] ss:$8 sm:$0x3]
    %1374 = vset.pattern.permute.xlu0 0
    %1375 = vperm.xlu0 %1374, %v1370
    %v1376 = vpop.permute.xlu0 %1375
    %v1379 = vlaneseq
    %v1380 = vshrl.u32 %v1379, 7
    %v1381 = vsub.s32 0, %v1380
    %v1382 = vrot.slane %v1372, %v1381
    %v1383 = vlaneseq
    %v1384 = vshrl.u32 %v1383, 7
    %v1385 = vsub.s32 1, %v1384
    %v1386 = vrot.slane %v1372, %v1385
    %v1389 = vmul.f32 %v1376, %v1382
    %v1390 = vmul.f32 %v1376, %v1386
    %v1391 = vadd.f32 %v1368, %v1389
    %v1392 = vadd.f32 %v1369, %v1390
    %v1393 = vld [vmem:[%s542] sm:$0xff]
    %s1394 = scalar_lea.vmem %s888, 38
    %v1395 = vld [vmem:[%s1394] ss:$8 sm:$0x3]
    %1397 = vset.pattern.permute.xlu0 0
    %1398 = vperm.xlu0 %1397, %v1393
    %v1399 = vpop.permute.xlu0 %1398
    %v1402 = vlaneseq
    %v1403 = vshrl.u32 %v1402, 7
    %v1404 = vsub.s32 0, %v1403
    %v1405 = vrot.slane %v1395, %v1404
    %v1406 = vlaneseq
    %v1407 = vshrl.u32 %v1406, 7
    %v1408 = vsub.s32 1, %v1407
    %v1409 = vrot.slane %v1395, %v1408
    %v1412 = vmul.f32 %v1399, %v1405
    %v1413 = vmul.f32 %v1399, %v1409
    %v1414 = vadd.f32 %v1391, %v1412
    %v1415 = vadd.f32 %v1392, %v1413
    %v1416 = vld [vmem:[%s566] sm:$0xff]
    %s1417 = scalar_lea.vmem %s888, 39
    %v1418 = vld [vmem:[%s1417] ss:$8 sm:$0x3]
    %1420 = vset.pattern.permute.xlu0 0
    %1421 = vperm.xlu0 %1420, %v1416
    %v1422 = vpop.permute.xlu0 %1421
    %v1425 = vlaneseq
    %v1426 = vshrl.u32 %v1425, 7
    %v1427 = vsub.s32 0, %v1426
    %v1428 = vrot.slane %v1418, %v1427
    %v1429 = vlaneseq
    %v1430 = vshrl.u32 %v1429, 7
    %v1431 = vsub.s32 1, %v1430
    %v1432 = vrot.slane %v1418, %v1431
    %v1435 = vmul.f32 %v1422, %v1428
    %v1436 = vmul.f32 %v1422, %v1432
    %v1437 = vadd.f32 %v1414, %v1435
    %v1438 = vadd.f32 %v1415, %v1436
    %v1439 = vld [vmem:[%s590] sm:$0xff]
    %s1440 = scalar_lea.vmem %s888, 48
    %v1441 = vld [vmem:[%s1440] ss:$8 sm:$0x3]
    %1443 = vset.pattern.permute.xlu0 0
    %1444 = vperm.xlu0 %1443, %v1439
    %v1445 = vpop.permute.xlu0 %1444
    %v1448 = vlaneseq
    %v1449 = vshrl.u32 %v1448, 7
    %v1450 = vsub.s32 0, %v1449
    %v1451 = vrot.slane %v1441, %v1450
    %v1452 = vlaneseq
    %v1453 = vshrl.u32 %v1452, 7
    %v1454 = vsub.s32 1, %v1453
    %v1455 = vrot.slane %v1441, %v1454
    %v1458 = vmul.f32 %v1445, %v1451
    %v1459 = vmul.f32 %v1445, %v1455
    %v1460 = vadd.f32 %v1437, %v1458
    %v1461 = vadd.f32 %v1438, %v1459
    %v1462 = vld [vmem:[%s614] sm:$0xff]
    %s1463 = scalar_lea.vmem %s888, 49
    %v1464 = vld [vmem:[%s1463] ss:$8 sm:$0x3]
    %1466 = vset.pattern.permute.xlu0 0
    %1467 = vperm.xlu0 %1466, %v1462
    %v1468 = vpop.permute.xlu0 %1467
    %v1471 = vlaneseq
    %v1472 = vshrl.u32 %v1471, 7
    %v1473 = vsub.s32 0, %v1472
    %v1474 = vrot.slane %v1464, %v1473
    %v1475 = vlaneseq
    %v1476 = vshrl.u32 %v1475, 7
    %v1477 = vsub.s32 1, %v1476
    %v1478 = vrot.slane %v1464, %v1477
    %v1481 = vmul.f32 %v1468, %v1474
    %v1482 = vmul.f32 %v1468, %v1478
    %v1483 = vadd.f32 %v1460, %v1481
    %v1484 = vadd.f32 %v1461, %v1482
    %v1485 = vld [vmem:[%s638] sm:$0xff]
    %s1486 = scalar_lea.vmem %s888, 50
    %v1487 = vld [vmem:[%s1486] ss:$8 sm:$0x3]
    %1489 = vset.pattern.permute.xlu0 0
    %1490 = vperm.xlu0 %1489, %v1485
    %v1491 = vpop.permute.xlu0 %1490
    %v1494 = vlaneseq
    %v1495 = vshrl.u32 %v1494, 7
    %v1496 = vsub.s32 0, %v1495
    %v1497 = vrot.slane %v1487, %v1496
    %v1498 = vlaneseq
    %v1499 = vshrl.u32 %v1498, 7
    %v1500 = vsub.s32 1, %v1499
    %v1501 = vrot.slane %v1487, %v1500
    %v1504 = vmul.f32 %v1491, %v1497
    %v1505 = vmul.f32 %v1491, %v1501
    %v1506 = vadd.f32 %v1483, %v1504
    %v1507 = vadd.f32 %v1484, %v1505
    %v1508 = vld [vmem:[%s662] sm:$0xff]
    %s1509 = scalar_lea.vmem %s888, 51
    %v1510 = vld [vmem:[%s1509] ss:$8 sm:$0x3]
    %1512 = vset.pattern.permute.xlu0 0
    %1513 = vperm.xlu0 %1512, %v1508
    %v1514 = vpop.permute.xlu0 %1513
    %v1517 = vlaneseq
    %v1518 = vshrl.u32 %v1517, 7
    %v1519 = vsub.s32 0, %v1518
    %v1520 = vrot.slane %v1510, %v1519
    %v1521 = vlaneseq
    %v1522 = vshrl.u32 %v1521, 7
    %v1523 = vsub.s32 1, %v1522
    %v1524 = vrot.slane %v1510, %v1523
    %v1527 = vmul.f32 %v1514, %v1520
    %v1528 = vmul.f32 %v1514, %v1524
    %v1529 = vadd.f32 %v1506, %v1527
    %v1530 = vadd.f32 %v1507, %v1528
    %v1531 = vld [vmem:[%s686] sm:$0xff]
    %s1532 = scalar_lea.vmem %s888, 52
    %v1533 = vld [vmem:[%s1532] ss:$8 sm:$0x3]
    %1535 = vset.pattern.permute.xlu0 0
    %1536 = vperm.xlu0 %1535, %v1531
    %v1537 = vpop.permute.xlu0 %1536
    %v1540 = vlaneseq
    %v1541 = vshrl.u32 %v1540, 7
    %v1542 = vsub.s32 0, %v1541
    %v1543 = vrot.slane %v1533, %v1542
    %v1544 = vlaneseq
    %v1545 = vshrl.u32 %v1544, 7
    %v1546 = vsub.s32 1, %v1545
    %v1547 = vrot.slane %v1533, %v1546
    %v1550 = vmul.f32 %v1537, %v1543
    %v1551 = vmul.f32 %v1537, %v1547
    %v1552 = vadd.f32 %v1529, %v1550
    %v1553 = vadd.f32 %v1530, %v1551
    %v1554 = vld [vmem:[%s710] sm:$0xff]
    %s1555 = scalar_lea.vmem %s888, 53
    %v1556 = vld [vmem:[%s1555] ss:$8 sm:$0x3]
    %1558 = vset.pattern.permute.xlu0 0
    %1559 = vperm.xlu0 %1558, %v1554
    %v1560 = vpop.permute.xlu0 %1559
    %v1563 = vlaneseq
    %v1564 = vshrl.u32 %v1563, 7
    %v1565 = vsub.s32 0, %v1564
    %v1566 = vrot.slane %v1556, %v1565
    %v1567 = vlaneseq
    %v1568 = vshrl.u32 %v1567, 7
    %v1569 = vsub.s32 1, %v1568
    %v1570 = vrot.slane %v1556, %v1569
    %v1573 = vmul.f32 %v1560, %v1566
    %v1574 = vmul.f32 %v1560, %v1570
    %v1575 = vadd.f32 %v1552, %v1573
    %v1576 = vadd.f32 %v1553, %v1574
    %v1577 = vld [vmem:[%s734] sm:$0xff]
    %s1578 = scalar_lea.vmem %s888, 54
    %v1579 = vld [vmem:[%s1578] ss:$8 sm:$0x3]
    %1581 = vset.pattern.permute.xlu0 0
    %1582 = vperm.xlu0 %1581, %v1577
    %v1583 = vpop.permute.xlu0 %1582
    %v1586 = vlaneseq
    %v1587 = vshrl.u32 %v1586, 7
    %v1588 = vsub.s32 0, %v1587
    %v1589 = vrot.slane %v1579, %v1588
    %v1590 = vlaneseq
    %v1591 = vshrl.u32 %v1590, 7
    %v1592 = vsub.s32 1, %v1591
    %v1593 = vrot.slane %v1579, %v1592
    %v1596 = vmul.f32 %v1583, %v1589
    %v1597 = vmul.f32 %v1583, %v1593
    %v1598 = vadd.f32 %v1575, %v1596
    %v1599 = vadd.f32 %v1576, %v1597
    %v1600 = vld [vmem:[%s758] sm:$0xff]
    %s1601 = scalar_lea.vmem %s888, 55
    %v1602 = vld [vmem:[%s1601] ss:$8 sm:$0x3]
    %1604 = vset.pattern.permute.xlu0 0
    %1605 = vperm.xlu0 %1604, %v1600
    %v1606 = vpop.permute.xlu0 %1605
    %v1609 = vlaneseq
    %v1610 = vshrl.u32 %v1609, 7
    %v1611 = vsub.s32 0, %v1610
    %v1612 = vrot.slane %v1602, %v1611
    %v1613 = vlaneseq
    %v1614 = vshrl.u32 %v1613, 7
    %v1615 = vsub.s32 1, %v1614
    %v1616 = vrot.slane %v1602, %v1615
    %v1619 = vmul.f32 %v1606, %v1612
    %v1620 = vmul.f32 %v1606, %v1616
    %v1621 = vadd.f32 %v1598, %v1619
    %v1622 = vadd.f32 %v1599, %v1620
    %v1623 = vld [vmem:[%s782] sm:$0xff]
    %s1624 = scalar_lea.vmem %s888, 64
    %v1625 = vld [vmem:[%s1624] ss:$8 sm:$0x3]
    %1627 = vset.pattern.permute.xlu0 0
    %1628 = vperm.xlu0 %1627, %v1623
    %v1629 = vpop.permute.xlu0 %1628
    %v1632 = vlaneseq
    %v1633 = vshrl.u32 %v1632, 7
    %v1634 = vsub.s32 0, %v1633
    %v1635 = vrot.slane %v1625, %v1634
    %v1636 = vlaneseq
    %v1637 = vshrl.u32 %v1636, 7
    %v1638 = vsub.s32 1, %v1637
    %v1639 = vrot.slane %v1625, %v1638
    %v1642 = vmul.f32 %v1629, %v1635
    %v1643 = vmul.f32 %v1629, %v1639
    %v1644 = vadd.f32 %v1621, %v1642
    %v1645 = vadd.f32 %v1622, %v1643
    %v1646 = vld [vmem:[%s806] sm:$0xff]
    %s1647 = scalar_lea.vmem %s888, 65
    %v1648 = vld [vmem:[%s1647] ss:$8 sm:$0x3]
    %1650 = vset.pattern.permute.xlu0 0
    %1651 = vperm.xlu0 %1650, %v1646
    %v1652 = vpop.permute.xlu0 %1651
    %v1655 = vlaneseq
    %v1656 = vshrl.u32 %v1655, 7
    %v1657 = vsub.s32 0, %v1656
    %v1658 = vrot.slane %v1648, %v1657
    %v1659 = vlaneseq
    %v1660 = vshrl.u32 %v1659, 7
    %v1661 = vsub.s32 1, %v1660
    %v1662 = vrot.slane %v1648, %v1661
    %v1665 = vmul.f32 %v1652, %v1658
    %v1666 = vmul.f32 %v1652, %v1662
    %v1667 = vadd.f32 %v1644, %v1665
    %v1668 = vadd.f32 %v1645, %v1666
    %v1669 = vld [vmem:[%s830] sm:$0xff]
    %s1670 = scalar_lea.vmem %s888, 66
    %v1671 = vld [vmem:[%s1670] ss:$8 sm:$0x3]
    %1673 = vset.pattern.permute.xlu0 0
    %1674 = vperm.xlu0 %1673, %v1669
    %v1675 = vpop.permute.xlu0 %1674
    %v1678 = vlaneseq
    %v1679 = vshrl.u32 %v1678, 7
    %v1680 = vsub.s32 0, %v1679
    %v1681 = vrot.slane %v1671, %v1680
    %v1682 = vlaneseq
    %v1683 = vshrl.u32 %v1682, 7
    %v1684 = vsub.s32 1, %v1683
    %v1685 = vrot.slane %v1671, %v1684
    %v1688 = vmul.f32 %v1675, %v1681
    %v1689 = vmul.f32 %v1675, %v1685
    %v1690 = vadd.f32 %v1667, %v1688
    %v1691 = vadd.f32 %v1668, %v1689
    %v1692 = vld [vmem:[%s854] sm:$0xff]
    %s1693 = scalar_lea.vmem %s888, 67
    %v1694 = vld [vmem:[%s1693] ss:$8 sm:$0x3]
    %1696 = vset.pattern.permute.xlu0 0
    %1697 = vperm.xlu0 %1696, %v1692
    %v1698 = vpop.permute.xlu0 %1697
    %v1701 = vlaneseq
    %v1702 = vshrl.u32 %v1701, 7
    %v1703 = vsub.s32 0, %v1702
    %v1704 = vrot.slane %v1694, %v1703
    %v1705 = vlaneseq
    %v1706 = vshrl.u32 %v1705, 7
    %v1707 = vsub.s32 1, %v1706
    %v1708 = vrot.slane %v1694, %v1707
    %v1711 = vmul.f32 %v1698, %v1704
    %v1712 = vmul.f32 %v1698, %v1708
    %v1713 = vadd.f32 %v1690, %v1711
    %v1714 = vadd.f32 %v1691, %v1712
    %v1715 = vadd.f32 %v1713, %v881
    %v1716 = vadd.f32 %v1714, %v881
    %s1717 = scalar_lea.vmem [#allocation2], 16
    %1718 = vst [vmem:[%s1717] sm:$0xff] %v1715
    %1719 = vst [vmem:[%s1717 + $0x8] sm:$0xff] %v1716
    // Predicated region
    $region14: #{tpu_custom_call.1} parent=1 // pred_check
      _
    $region15: #{tpu_custom_call.1} parent=1 // pred_check_branch
      %1721 = sbr.rel (0) target = $region17
    $region16: #{tpu_custom_call.1} parent=1 // pred_region
      %s1723 = ssub.s32 512, 512
      %1724 = vsyncadd [#allocation3], %s1723
      %s1725 = sshll.u32 [#allocation2], 4
      %s1726 = int_to_ptr.vmem [resolvable:$true] %s1725
      %1731 = dma.vmem_to_hbm [thread:$0]  %s1726, 512, %s3, [#allocation3], 256, 256, 16
    $region17: #{tpu_custom_call.1} parent=1 // pred_fallthru
      _
    // Predicated region
    $region18: #{tpu_custom_call.1} parent=1 // pred_check
      _
    $region19: #{tpu_custom_call.1} parent=1 // pred_check_branch
      %1733 = sbr.rel (0) target = $region21
    $region20: #{tpu_custom_call.1} parent=1 // pred_region
      %1734 = dma.done [#allocation3], 512
    $region21: #{tpu_custom_call.1} parent=1 // pred_fallthru
      _
    %1735 = vsyncpa [#allocation3], 1

</llo_original>
